<compile_context>
chip_gen: v7x
topology: tpu7x:2x2x1
jax: 0.10.0
libtpu: 0.0.40
codegen_flags: <defaults>
</compile_context>

<pallas_src>
import jax
import jax.numpy as jnp
from jax import lax
from jax.experimental import pallas as pl
from jax.experimental.pallas import tpu as pltpu

# ----- small, TPU-friendly shapes (stand-in for bert-base-cased 768/12) -----
B = 2            # batch
L = 16           # sequence length (<= 512 path of Transformer.forward)
H = 128          # hidden dim (lane-aligned stand-in for 768)
NUM_HEADS = 2
HEAD_DIM = H // NUM_HEADS
FFN = 256
VOCAB = 100
NUM_TYPES = 2
N_ENT = 4        # N_max entities per doc
NUM_REL = 8      # cfg.num_rel (W_r output dim) -- head layers unused in forward

BIG = 1e9        # additive mask magnitude


# ------------------------------ fused Pallas kernel ------------------------------

def _layernorm(z, g, b):
    mu = jnp.mean(z, axis=-1, keepdims=True)
    var = jnp.mean((z - mu) * (z - mu), axis=-1, keepdims=True)
    return (z - mu) * lax.rsqrt(var + 1e-12) * g + b


def _mm(a, w_bf16):
    # MXU matmul: bf16 inputs, f32 accumulation.
    return jnp.dot(a.astype(jnp.bfloat16), w_bf16,
                   preferred_element_type=jnp.float32)


def _encoder_kernel(
    # inputs (per batch element b)
    emb_ref, mask_ref, ent_mask_ref,
    ln0_g_ref, ln0_b_ref,
    wqkv_ref, bqkv_ref,
    wo_ref, bo_ref, ln1_g_ref, ln1_b_ref,
    w1_ref, b1_ref, w2_ref, b2_ref, ln2_g_ref, ln2_b_ref,
    # outputs
    tok_ref, att_ref, ent_ref,
    # scratch
    ctx_scratch,
):
    # ---- embeddings -> LayerNorm (no residual; no zero-add) ----
    x0 = _layernorm(emb_ref[0], ln0_g_ref[...], ln0_b_ref[...])          # (L, H) f32

    # ---- fused QKV projection: one MXU pass over the merged [H, 3H] weight ----
    qkv = _mm(x0, wqkv_ref[...]) + bqkv_ref[...]                         # (L, 3H) f32

    # ---- per-head attention; heads are static 64-lane slices of qkv ----
    scale = 1.0 / float(HEAD_DIM) ** 0.5
    bias = (mask_ref[0] - 1.0) * BIG                                     # (1, L): 0 / -1e9
    for h in range(NUM_HEADS):
        q = qkv[:, h * HEAD_DIM:(h + 1) * HEAD_DIM]
        k = qkv[:, H + h * HEAD_DIM:H + (h + 1) * HEAD_DIM]
        v = qkv[:, 2 * H + h * HEAD_DIM:2 * H + (h + 1) * HEAD_DIM]
        s = lax.dot_general(q.astype(jnp.bfloat16), k.astype(jnp.bfloat16),
                            (((1,), (1,)), ((), ())),
                            preferred_element_type=jnp.float32) * scale  # (L, L)
        s = s + bias                                                     # mask keys
        s = s - jnp.max(s, axis=-1, keepdims=True)
        p = jnp.exp(s)
        p = p * pl.reciprocal(jnp.sum(p, axis=-1, keepdims=True))        # exact recip
        att_ref[0, h] = p                                                # last-layer attn probs
        ctx_scratch[:, h * HEAD_DIM:(h + 1) * HEAD_DIM] = jnp.dot(
            p.astype(jnp.bfloat16), v.astype(jnp.bfloat16),
            preferred_element_type=jnp.float32)

    ctx = ctx_scratch[...]                                               # (L, H)

    # ---- output projection + residual LN, FFN + residual LN ----
    attn_out = _mm(ctx, wo_ref[...]) + bo_ref[...]
    x1 = _layernorm(x0 + attn_out, ln1_g_ref[...], ln1_b_ref[...])
    h1 = jax.nn.gelu(_mm(x1, w1_ref[...]) + b1_ref[...], approximate=True)
    ffn_out = _mm(h1, w2_ref[...]) + b2_ref[...]
    x2 = _layernorm(x1 + ffn_out, ln2_g_ref[...], ln2_b_ref[...])
    tok_ref[0] = x2                                                      # batch_token_embs[b]

    # ---- compute_entity_embs: masked logsumexp over mention positions ----
    # Single additive-mask broadcast reused for both max and exp (no double where).
    msk = ent_mask_ref[0]                                                # (N_ENT, L) in {0,1}
    masked = x2[None, :, :] + ((msk - 1.0) * BIG)[:, :, None]            # (N_ENT, L, H)
    mx = jnp.max(masked, axis=1)                                         # (N_ENT, H)
    has = jnp.sum(msk, axis=1, keepdims=True) > 0.0                      # (N_ENT, 1)
    mx_safe = jnp.where(has, mx, 0.0)
    ssum = jnp.sum(jnp.exp(masked - mx_safe[:, None, :]), axis=1)        # excluded -> exp(-BIG)=0
    lse = mx_safe + jnp.log(jnp.maximum(ssum, 1e-30))
    ent_ref[0] = jnp.where(has, lse, 0.0)                                # zeros for absent entities


def encoder_forward(emb, mask3, ent_mask, params):
    """One fused pallas_call over grid=(B,). All weights stay resident in VMEM."""
    def wmap(*_):  # constant block (weights) -- loaded once, revisited across grid
        return (0, 0)

    def bmap3(b):  # per-batch 3D block
        return (b, 0, 0)

    in_specs = [
        pl.BlockSpec((1, L, H), bmap3),                 # emb
        pl.BlockSpec((1, 1, L), bmap3),                 # attention mask
        pl.BlockSpec((1, N_ENT, L), bmap3),             # entity membership mask
        pl.BlockSpec((1, H), wmap),                     # ln0_g
        pl.BlockSpec((1, H), wmap),                     # ln0_b
        pl.BlockSpec((H, 3 * H), wmap),                 # wqkv (bf16)
        pl.BlockSpec((1, 3 * H), wmap),                 # bqkv
        pl.BlockSpec((H, H), wmap),                     # wo (bf16)
        pl.BlockSpec((1, H), wmap),                     # bo
        pl.BlockSpec((1, H), wmap),                     # ln1_g
        pl.BlockSpec((1, H), wmap),                     # ln1_b
        pl.BlockSpec((H, FFN), wmap),                   # w1 (bf16)
        pl.BlockSpec((1, FFN), wmap),                   # b1
        pl.BlockSpec((FFN, H), wmap),                   # w2 (bf16)
        pl.BlockSpec((1, H), wmap),                     # b2
        pl.BlockSpec((1, H), wmap),                     # ln2_g
        pl.BlockSpec((1, H), wmap),                     # ln2_b
    ]
    out_specs = [
        pl.BlockSpec((1, L, H), bmap3),                          # token_embs
        pl.BlockSpec((1, NUM_HEADS, L, L), lambda b: (b, 0, 0, 0)),  # token_atts
        pl.BlockSpec((1, N_ENT, H), bmap3),                      # entity_embs
    ]
    out_shape = (
        jax.ShapeDtypeStruct((B, L, H), jnp.float32),
        jax.ShapeDtypeStruct((B, NUM_HEADS, L, L), jnp.float32),
        jax.ShapeDtypeStruct((B, N_ENT, H), jnp.float32),
    )
    return pl.pallas_call(
        _encoder_kernel,
        grid=(B,),
        in_specs=in_specs,
        out_specs=out_specs,
        out_shape=out_shape,
        scratch_shapes=[pltpu.VMEM((L, H), jnp.float32)],
        compiler_params=pltpu.CompilerParams(dimension_semantics=("parallel",)),
    )(
        emb, mask3, ent_mask,
        params["ln0_g"], params["ln0_b"],
        params["w_qkv"], params["b_qkv"],
        params["wo"], params["bo"], params["ln1_g"], params["ln1_b"],
        params["w1"], params["b1"], params["w2"], params["b2"],
        params["ln2_g"], params["ln2_b"],
    )


# ------------------------------ model wrapper -------------------------------

def init_params(key):
    ks = jax.random.split(key, 20)
    s = 0.02
    bf = jnp.bfloat16
    wq = s * jax.random.normal(ks[3], (H, H), jnp.float32)
    wk = s * jax.random.normal(ks[4], (H, H), jnp.float32)
    wv = s * jax.random.normal(ks[5], (H, H), jnp.float32)
    p = {
        "word_emb": s * jax.random.normal(ks[0], (VOCAB, H), jnp.float32),
        "pos_emb":  s * jax.random.normal(ks[1], (L, H), jnp.float32),
        "type_emb": s * jax.random.normal(ks[2], (NUM_TYPES, H), jnp.float32),
        "ln0_g": jnp.ones((1, H), jnp.float32), "ln0_b": jnp.zeros((1, H), jnp.float32),
        # merged QKV weight (bf16 for the MXU); biases / LN params stay f32
        "w_qkv": jnp.concatenate([wq, wk, wv], axis=1).astype(bf),
        "b_qkv": jnp.zeros((1, 3 * H), jnp.float32),
        "wo": (s * jax.random.normal(ks[6], (H, H), jnp.float32)).astype(bf),
        "bo": jnp.zeros((1, H), jnp.float32),
        "ln1_g": jnp.ones((1, H), jnp.float32), "ln1_b": jnp.zeros((1, H), jnp.float32),
        "w1": (s * jax.random.normal(ks[7], (H, FFN), jnp.float32)).astype(bf),
        "b1": jnp.zeros((1, FFN), jnp.float32),
        "w2": (s * jax.random.normal(ks[8], (FFN, H), jnp.float32)).astype(bf),
        "b2": jnp.zeros((1, H), jnp.float32),
        "ln2_g": jnp.ones((1, H), jnp.float32), "ln2_b": jnp.zeros((1, H), jnp.float32),
        # Head parameters declared in Model.__init__ (W_h, W_t, W_r) -- unused in forward.
        "W_h": s * jax.random.normal(ks[9], (H, H), jnp.float32),
        "W_t": s * jax.random.normal(ks[10], (H, H), jnp.float32),
        "W_r": s * jax.random.normal(ks[11], (NUM_REL, H, H), jnp.float32),
    }
    return p


@jax.jit
def model_forward(params, token_seqs, token_masks, token_types, ent_mask):
    # --- Transformer (<=512 tokens path): embedding gathers (glue) + fused Pallas encoder ---
    we = jnp.take(params["word_emb"], token_seqs, axis=0)          # (B, L, H)
    te = jnp.take(params["type_emb"], token_types, axis=0)         # (B, L, H)
    pe = params["pos_emb"][None, :, :]                             # (1, L, H)
    emb = (we + te + pe).astype(jnp.float32)                       # (B, L, H)
    mask3 = token_masks.reshape(B, 1, L).astype(jnp.float32)

    token_embs, token_atts, entity_embs = encoder_forward(emb, mask3, ent_mask, params)
    # token_embs : (B, L, H)            -- batch_token_embs
    # token_atts : (B, NUM_HEADS, L, L) -- batch_token_atts (last layer)
    # entity_embs: (B, N_ENT, H)        -- compute_entity_embs logsumexp

    entity_mask = (jnp.sum(ent_mask, axis=-1) > 0).astype(jnp.float32)  # (B, N_ENT)
    return token_embs, token_atts, entity_embs, entity_mask


# ---------------------------------- main -------------------------------------

if __name__ == "__main__":
    key = jax.random.PRNGKey(0)
    kp, k1, k2 = jax.random.split(key, 3)
    params = init_params(kp)

    token_seqs = jax.random.randint(k1, (B, L), 0, VOCAB, dtype=jnp.int32)
    # mask out the tail of doc 1 to exercise the attention mask
    token_masks = jnp.concatenate(
        [jnp.ones((1, L), jnp.float32),
         jnp.concatenate([jnp.ones((1, 12), jnp.float32), jnp.zeros((1, 4), jnp.float32)], axis=1)],
        axis=0)
    token_types = jnp.zeros((B, L), jnp.int32)

    # batch_start_mpos (dict of entity -> mention positions) as a dense membership mask
    ent_mask = jnp.zeros((B, N_ENT, L), jnp.float32)
    mentions = {0: {0: [1, 5], 1: [3], 2: [7, 9]},
                1: {0: [2, 4, 6], 1: [8]}}
    for did, ents in mentions.items():
        for eid, poss in ents.items():
            for pos in poss:
                ent_mask = ent_mask.at[did, eid, pos].set(1.0)

    outs = model_forward(params, token_seqs, token_masks, token_types, ent_mask)
    token_embs, token_atts, entity_embs, entity_mask = jax.block_until_ready(outs)

    # light sanity check of the in-kernel entity logsumexp against pure JAX
    ref = jnp.where(
        (ent_mask.sum(-1) > 0)[..., None],
        jax.scipy.special.logsumexp(
            jnp.where(ent_mask[..., None] > 0, token_embs[:, None, :, :], -jnp.inf), axis=2),
        0.0)
    assert jnp.allclose(entity_embs, ref, atol=1e-4), "entity logsumexp mismatch"
    # attention probabilities are a proper softmax over keys
    assert jnp.allclose(token_atts.sum(-1), 1.0, atol=1e-3), "attention rows must sum to 1"
    assert token_embs.shape == (B, L, H)
    assert token_atts.shape == (B, NUM_HEADS, L, L)
    assert entity_embs.shape == (B, N_ENT, H)
    assert entity_mask.shape == (B, N_ENT)

    print("KERNEL_OK")
</pallas_src>

<mosaic_0001>
module attributes {stable_mosaic.version = 11 : i64} {
  func.func @_encoder_kernel(%arg0: i32, %arg1: memref<1x16x128xf32, #tpu.memory_space<vmem>>, %arg2: memref<1x1x16xf32, #tpu.memory_space<vmem>>, %arg3: memref<1x4x16xf32, #tpu.memory_space<vmem>>, %arg4: memref<1x128xf32, #tpu.memory_space<vmem>>, %arg5: memref<1x128xf32, #tpu.memory_space<vmem>>, %arg6: memref<128x384xbf16, #tpu.memory_space<vmem>>, %arg7: memref<1x384xf32, #tpu.memory_space<vmem>>, %arg8: memref<128x128xbf16, #tpu.memory_space<vmem>>, %arg9: memref<1x128xf32, #tpu.memory_space<vmem>>, %arg10: memref<1x128xf32, #tpu.memory_space<vmem>>, %arg11: memref<1x128xf32, #tpu.memory_space<vmem>>, %arg12: memref<128x256xbf16, #tpu.memory_space<vmem>>, %arg13: memref<1x256xf32, #tpu.memory_space<vmem>>, %arg14: memref<256x128xbf16, #tpu.memory_space<vmem>>, %arg15: memref<1x128xf32, #tpu.memory_space<vmem>>, %arg16: memref<1x128xf32, #tpu.memory_space<vmem>>, %arg17: memref<1x128xf32, #tpu.memory_space<vmem>>, %arg18: memref<1x16x128xf32, #tpu.memory_space<vmem>>, %arg19: memref<1x2x16x16xf32, #tpu.memory_space<vmem>>, %arg20: memref<1x4x128xf32, #tpu.memory_space<vmem>>, %arg21: memref<16x128xf32, #tpu.memory_space<vmem>>) attributes {dimension_semantics = [#tpu.dimension_semantics<parallel>], iteration_bounds = array<i64: 2>, scalar_prefetch = 0 : i64, scratch_operands = 1 : i64, tpu.core_type = #tpu.core_type<tc>, window_params = [{transform_indices = @transform_0, window_bounds = array<i64: 1, 16, 128>}, {transform_indices = @transform_1, window_bounds = array<i64: 1, 1, 16>}, {transform_indices = @transform_2, window_bounds = array<i64: 1, 4, 16>}, {pipeline_mode = #tpu.pipeline_mode<synchronous>, transform_indices = @transform_3, window_bounds = array<i64: 1, 128>}, {pipeline_mode = #tpu.pipeline_mode<synchronous>, transform_indices = @transform_4, window_bounds = array<i64: 1, 128>}, {pipeline_mode = #tpu.pipeline_mode<synchronous>, transform_indices = @transform_5, window_bounds = array<i64: 128, 384>}, {pipeline_mode = #tpu.pipeline_mode<synchronous>, transform_indices = @transform_6, window_bounds = array<i64: 1, 384>}, {pipeline_mode = #tpu.pipeline_mode<synchronous>, transform_indices = @transform_7, window_bounds = array<i64: 128, 128>}, {pipeline_mode = #tpu.pipeline_mode<synchronous>, transform_indices = @transform_8, window_bounds = array<i64: 1, 128>}, {pipeline_mode = #tpu.pipeline_mode<synchronous>, transform_indices = @transform_9, window_bounds = array<i64: 1, 128>}, {pipeline_mode = #tpu.pipeline_mode<synchronous>, transform_indices = @transform_10, window_bounds = array<i64: 1, 128>}, {pipeline_mode = #tpu.pipeline_mode<synchronous>, transform_indices = @transform_11, window_bounds = array<i64: 128, 256>}, {pipeline_mode = #tpu.pipeline_mode<synchronous>, transform_indices = @transform_12, window_bounds = array<i64: 1, 256>}, {pipeline_mode = #tpu.pipeline_mode<synchronous>, transform_indices = @transform_13, window_bounds = array<i64: 256, 128>}, {pipeline_mode = #tpu.pipeline_mode<synchronous>, transform_indices = @transform_14, window_bounds = array<i64: 1, 128>}, {pipeline_mode = #tpu.pipeline_mode<synchronous>, transform_indices = @transform_15, window_bounds = array<i64: 1, 128>}, {pipeline_mode = #tpu.pipeline_mode<synchronous>, transform_indices = @transform_16, window_bounds = array<i64: 1, 128>}, {transform_indices = @transform_17, window_bounds = array<i64: 1, 16, 128>}, {transform_indices = @transform_18, window_bounds = array<i64: 1, 2, 16, 16>}, {transform_indices = @transform_19, window_bounds = array<i64: 1, 4, 128>}]} {
    %c0 = arith.constant 0 : index
    %c0_0 = arith.constant 0 : index
    %c0_1 = arith.constant 0 : index
    %0 = vector.load %arg1[%c0, %c0_0, %c0_1] : memref<1x16x128xf32, #tpu.memory_space<vmem>>, vector<1x16x128xf32>
    %1 = vector.shape_cast %0 : vector<1x16x128xf32> to vector<16x128xf32>
    %c0_2 = arith.constant 0 : index
    %c0_3 = arith.constant 0 : index
    %2 = vector.load %arg4[%c0_2, %c0_3] : memref<1x128xf32, #tpu.memory_space<vmem>>, vector<1x128xf32>
    %c0_4 = arith.constant 0 : index
    %c0_5 = arith.constant 0 : index
    %3 = vector.load %arg5[%c0_4, %c0_5] : memref<1x128xf32, #tpu.memory_space<vmem>>, vector<1x128xf32>
    %cst = arith.constant dense<0.000000e+00> : vector<16xf32>
    %4 = vector.multi_reduction <add>, %1, %cst [1] : vector<16x128xf32> to vector<16xf32>
    %5 = vector.shape_cast %4 : vector<16xf32> to vector<16x1xf32>
    %cst_6 = arith.constant 1.280000e+02 : f32
    %6 = vector.broadcast %cst_6 : f32 to vector<16x1xf32>
    %7 = arith.divf %5, %6 : vector<16x1xf32>
    %8 = vector.broadcast %7 : vector<16x1xf32> to vector<16x128xf32>
    %9 = arith.subf %1, %8 : vector<16x128xf32>
    %10 = vector.broadcast %7 : vector<16x1xf32> to vector<16x128xf32>
    %11 = arith.subf %1, %10 : vector<16x128xf32>
    %12 = arith.mulf %9, %11 : vector<16x128xf32>
    %cst_7 = arith.constant dense<0.000000e+00> : vector<16xf32>
    %13 = vector.multi_reduction <add>, %12, %cst_7 [1] : vector<16x128xf32> to vector<16xf32>
    %14 = vector.shape_cast %13 : vector<16xf32> to vector<16x1xf32>
    %cst_8 = arith.constant 1.280000e+02 : f32
    %15 = vector.broadcast %cst_8 : f32 to vector<16x1xf32>
    %16 = arith.divf %14, %15 : vector<16x1xf32>
    %17 = vector.broadcast %7 : vector<16x1xf32> to vector<16x128xf32>
    %18 = arith.subf %1, %17 : vector<16x128xf32>
    %cst_9 = arith.constant 9.99999996E-13 : f32
    %19 = vector.broadcast %cst_9 : f32 to vector<16x1xf32>
    %20 = arith.addf %16, %19 : vector<16x1xf32>
    %21 = math.rsqrt %20 : vector<16x1xf32>
    %22 = vector.broadcast %21 : vector<16x1xf32> to vector<16x128xf32>
    %23 = arith.mulf %18, %22 : vector<16x128xf32>
    %24 = vector.broadcast %2 : vector<1x128xf32> to vector<16x128xf32>
    %25 = arith.mulf %23, %24 : vector<16x128xf32>
    %26 = vector.broadcast %3 : vector<1x128xf32> to vector<16x128xf32>
    %27 = arith.addf %25, %26 : vector<16x128xf32>
    %c0_10 = arith.constant 0 : index
    %c0_11 = arith.constant 0 : index
    %28 = vector.load %arg6[%c0_10, %c0_11] : memref<128x384xbf16, #tpu.memory_space<vmem>>, vector<128x384xbf16>
    %29 = arith.truncf %27 : vector<16x128xf32> to vector<16x128xbf16>
    %cst_12 = arith.constant dense<0.000000e+00> : vector<16x384xf32>
    %30 = tpu.matmul %29, %28, %cst_12 {dimension_numbers = #tpu.dot_dimension_numbers<[1], [0], [0], [1], [0, 0, 1, 1], [], []>} : vector<16x128xbf16>, vector<128x384xbf16>, vector<16x384xf32> -> vector<16x384xf32>
    %c0_13 = arith.constant 0 : index
    %c0_14 = arith.constant 0 : index
    %31 = vector.load %arg7[%c0_13, %c0_14] : memref<1x384xf32, #tpu.memory_space<vmem>>, vector<1x384xf32>
    %32 = vector.broadcast %31 : vector<1x384xf32> to vector<16x384xf32>
    %33 = arith.addf %30, %32 : vector<16x384xf32>
    %c0_15 = arith.constant 0 : index
    %c0_16 = arith.constant 0 : index
    %c0_17 = arith.constant 0 : index
    %34 = vector.load %arg2[%c0_15, %c0_16, %c0_17] : memref<1x1x16xf32, #tpu.memory_space<vmem>>, vector<1x1x16xf32>
    %35 = vector.shape_cast %34 : vector<1x1x16xf32> to vector<1x16xf32>
    %cst_18 = arith.constant 1.000000e+00 : f32
    %36 = vector.broadcast %cst_18 : f32 to vector<1x16xf32>
    %37 = arith.subf %35, %36 : vector<1x16xf32>
    %cst_19 = arith.constant 1.000000e+09 : f32
    %38 = vector.broadcast %cst_19 : f32 to vector<1x16xf32>
    %39 = arith.mulf %37, %38 : vector<1x16xf32>
    %40 = vector.extract_strided_slice %33 {offsets = [0, 0], sizes = [16, 64], strides = [1, 1]} : vector<16x384xf32> to vector<16x64xf32>
    %41 = vector.extract_strided_slice %33 {offsets = [0, 128], sizes = [16, 64], strides = [1, 1]} : vector<16x384xf32> to vector<16x64xf32>
    %42 = vector.extract_strided_slice %33 {offsets = [0, 256], sizes = [16, 64], strides = [1, 1]} : vector<16x384xf32> to vector<16x64xf32>
    %43 = arith.truncf %40 : vector<16x64xf32> to vector<16x64xbf16>
    %44 = arith.truncf %41 : vector<16x64xf32> to vector<16x64xbf16>
    %cst_20 = arith.constant dense<0.000000e+00> : vector<16x16xf32>
    %45 = tpu.matmul %43, %44, %cst_20 {dimension_numbers = #tpu.dot_dimension_numbers<[1], [1], [0], [0], [0, 0, 1, 0], [], []>} : vector<16x64xbf16>, vector<16x64xbf16>, vector<16x16xf32> -> vector<16x16xf32>
    %cst_21 = arith.constant 1.250000e-01 : f32
    %46 = vector.broadcast %cst_21 : f32 to vector<16x16xf32>
    %47 = arith.mulf %45, %46 : vector<16x16xf32>
    %48 = vector.broadcast %39 : vector<1x16xf32> to vector<16x16xf32>
    %49 = arith.addf %47, %48 : vector<16x16xf32>
    %cst_22 = arith.constant dense<0xFF800000> : vector<16xf32>
    %50 = vector.multi_reduction <maximumf>, %49, %cst_22 [1] : vector<16x16xf32> to vector<16xf32>
    %51 = vector.shape_cast %50 : vector<16xf32> to vector<16x1xf32>
    %52 = vector.broadcast %51 : vector<16x1xf32> to vector<16x16xf32>
    %53 = arith.subf %49, %52 : vector<16x16xf32>
    %54 = math.exp %53 : vector<16x16xf32>
    %cst_23 = arith.constant dense<0.000000e+00> : vector<16xf32>
    %55 = vector.multi_reduction <add>, %54, %cst_23 [1] : vector<16x16xf32> to vector<16xf32>
    %56 = vector.shape_cast %55 : vector<16xf32> to vector<16x1xf32>
    %57 = tpu.reciprocal %56 : vector<16x1xf32> -> vector<16x1xf32>
    %58 = vector.broadcast %57 : vector<16x1xf32> to vector<16x16xf32>
    %59 = arith.mulf %54, %58 : vector<16x16xf32>
    %c0_24 = arith.constant 0 : index
    %c0_25 = arith.constant 0 : index
    %c0_26 = arith.constant 0 : index
    %c0_27 = arith.constant 0 : index
    %60 = vector.load %arg19[%c0_24, %c0_25, %c0_26, %c0_27] : memref<1x2x16x16xf32, #tpu.memory_space<vmem>>, vector<1x1x16x16xf32>
    %61 = vector.shape_cast %60 : vector<1x1x16x16xf32> to vector<16x16xf32>
    %62 = vector.shape_cast %59 : vector<16x16xf32> to vector<1x1x16x16xf32>
    tpu.vector_store %arg19[%c0_24, %c0_25, %c0_26, %c0_27], %62 {strides = array<i32>} : memref<1x2x16x16xf32, #tpu.memory_space<vmem>>, vector<1x1x16x16xf32>,
    %63 = arith.truncf %59 : vector<16x16xf32> to vector<16x16xbf16>
    %64 = arith.truncf %42 : vector<16x64xf32> to vector<16x64xbf16>
    %cst_28 = arith.constant dense<0.000000e+00> : vector<16x64xf32>
    %65 = tpu.matmul %63, %64, %cst_28 {dimension_numbers = #tpu.dot_dimension_numbers<[1], [0], [0], [1], [0, 0, 1, 1], [], []>} : vector<16x16xbf16>, vector<16x64xbf16>, vector<16x64xf32> -> vector<16x64xf32>
    %c0_29 = arith.constant 0 : index
    %c0_30 = arith.constant 0 : index
    %66 = vector.load %arg21[%c0_29, %c0_30] : memref<16x128xf32, #tpu.memory_space<vmem>>, vector<16x64xf32>
    tpu.vector_store %arg21[%c0_29, %c0_30], %65 {strides = array<i32>} : memref<16x128xf32, #tpu.memory_space<vmem>>, vector<16x64xf32>,
    %67 = vector.extract_strided_slice %33 {offsets = [0, 64], sizes = [16, 64], strides = [1, 1]} : vector<16x384xf32> to vector<16x64xf32>
    %68 = vector.extract_strided_slice %33 {offsets = [0, 192], sizes = [16, 64], strides = [1, 1]} : vector<16x384xf32> to vector<16x64xf32>
    %69 = vector.extract_strided_slice %33 {offsets = [0, 320], sizes = [16, 64], strides = [1, 1]} : vector<16x384xf32> to vector<16x64xf32>
    %70 = arith.truncf %67 : vector<16x64xf32> to vector<16x64xbf16>
    %71 = arith.truncf %68 : vector<16x64xf32> to vector<16x64xbf16>
    %cst_31 = arith.constant dense<0.000000e+00> : vector<16x16xf32>
    %72 = tpu.matmul %70, %71, %cst_31 {dimension_numbers = #tpu.dot_dimension_numbers<[1], [1], [0], [0], [0, 0, 1, 0], [], []>} : vector<16x64xbf16>, vector<16x64xbf16>, vector<16x16xf32> -> vector<16x16xf32>
    %cst_32 = arith.constant 1.250000e-01 : f32
    %73 = vector.broadcast %cst_32 : f32 to vector<16x16xf32>
    %74 = arith.mulf %72, %73 : vector<16x16xf32>
    %75 = vector.broadcast %39 : vector<1x16xf32> to vector<16x16xf32>
    %76 = arith.addf %74, %75 : vector<16x16xf32>
    %cst_33 = arith.constant dense<0xFF800000> : vector<16xf32>
    %77 = vector.multi_reduction <maximumf>, %76, %cst_33 [1] : vector<16x16xf32> to vector<16xf32>
    %78 = vector.shape_cast %77 : vector<16xf32> to vector<16x1xf32>
    %79 = vector.broadcast %78 : vector<16x1xf32> to vector<16x16xf32>
    %80 = arith.subf %76, %79 : vector<16x16xf32>
    %81 = math.exp %80 : vector<16x16xf32>
    %cst_34 = arith.constant dense<0.000000e+00> : vector<16xf32>
    %82 = vector.multi_reduction <add>, %81, %cst_34 [1] : vector<16x16xf32> to vector<16xf32>
    %83 = vector.shape_cast %82 : vector<16xf32> to vector<16x1xf32>
    %84 = tpu.reciprocal %83 : vector<16x1xf32> -> vector<16x1xf32>
    %85 = vector.broadcast %84 : vector<16x1xf32> to vector<16x16xf32>
    %86 = arith.mulf %81, %85 : vector<16x16xf32>
    %c0_35 = arith.constant 0 : index
    %c1 = arith.constant 1 : index
    %c0_36 = arith.constant 0 : index
    %c0_37 = arith.constant 0 : index
    %87 = vector.load %arg19[%c0_35, %c1, %c0_36, %c0_37] : memref<1x2x16x16xf32, #tpu.memory_space<vmem>>, vector<1x1x16x16xf32>
    %88 = vector.shape_cast %87 : vector<1x1x16x16xf32> to vector<16x16xf32>
    %89 = vector.shape_cast %86 : vector<16x16xf32> to vector<1x1x16x16xf32>
    tpu.vector_store %arg19[%c0_35, %c1, %c0_36, %c0_37], %89 {strides = array<i32>} : memref<1x2x16x16xf32, #tpu.memory_space<vmem>>, vector<1x1x16x16xf32>,
    %90 = arith.truncf %86 : vector<16x16xf32> to vector<16x16xbf16>
    %91 = arith.truncf %69 : vector<16x64xf32> to vector<16x64xbf16>
    %cst_38 = arith.constant dense<0.000000e+00> : vector<16x64xf32>
    %92 = tpu.matmul %90, %91, %cst_38 {dimension_numbers = #tpu.dot_dimension_numbers<[1], [0], [0], [1], [0, 0, 1, 1], [], []>} : vector<16x16xbf16>, vector<16x64xbf16>, vector<16x64xf32> -> vector<16x64xf32>
    %c0_39 = arith.constant 0 : index
    %c64 = arith.constant 64 : index
    %93 = vector.load %arg21[%c0_39, %c64] : memref<16x128xf32, #tpu.memory_space<vmem>>, vector<16x64xf32>
    tpu.vector_store %arg21[%c0_39, %c64], %92 {strides = array<i32>} : memref<16x128xf32, #tpu.memory_space<vmem>>, vector<16x64xf32>,
    %c0_40 = arith.constant 0 : index
    %c0_41 = arith.constant 0 : index
    %94 = vector.load %arg21[%c0_40, %c0_41] : memref<16x128xf32, #tpu.memory_space<vmem>>, vector<16x128xf32>
    %c0_42 = arith.constant 0 : index
    %c0_43 = arith.constant 0 : index
    %95 = vector.load %arg8[%c0_42, %c0_43] : memref<128x128xbf16, #tpu.memory_space<vmem>>, vector<128x128xbf16>
    %96 = arith.truncf %94 : vector<16x128xf32> to vector<16x128xbf16>
    %cst_44 = arith.constant dense<0.000000e+00> : vector<16x128xf32>
    %97 = tpu.matmul %96, %95, %cst_44 {dimension_numbers = #tpu.dot_dimension_numbers<[1], [0], [0], [1], [0, 0, 1, 1], [], []>} : vector<16x128xbf16>, vector<128x128xbf16>, vector<16x128xf32> -> vector<16x128xf32>
    %c0_45 = arith.constant 0 : index
    %c0_46 = arith.constant 0 : index
    %98 = vector.load %arg9[%c0_45, %c0_46] : memref<1x128xf32, #tpu.memory_space<vmem>>, vector<1x128xf32>
    %99 = vector.broadcast %98 : vector<1x128xf32> to vector<16x128xf32>
    %100 = arith.addf %97, %99 : vector<16x128xf32>
    %101 = arith.addf %27, %100 : vector<16x128xf32>
    %c0_47 = arith.constant 0 : index
    %c0_48 = arith.constant 0 : index
    %102 = vector.load %arg10[%c0_47, %c0_48] : memref<1x128xf32, #tpu.memory_space<vmem>>, vector<1x128xf32>
    %c0_49 = arith.constant 0 : index
    %c0_50 = arith.constant 0 : index
    %103 = vector.load %arg11[%c0_49, %c0_50] : memref<1x128xf32, #tpu.memory_space<vmem>>, vector<1x128xf32>
    %cst_51 = arith.constant dense<0.000000e+00> : vector<16xf32>
    %104 = vector.multi_reduction <add>, %101, %cst_51 [1] : vector<16x128xf32> to vector<16xf32>
    %105 = vector.shape_cast %104 : vector<16xf32> to vector<16x1xf32>
    %cst_52 = arith.constant 1.280000e+02 : f32
    %106 = vector.broadcast %cst_52 : f32 to vector<16x1xf32>
    %107 = arith.divf %105, %106 : vector<16x1xf32>
    %108 = vector.broadcast %107 : vector<16x1xf32> to vector<16x128xf32>
    %109 = arith.subf %101, %108 : vector<16x128xf32>
    %110 = vector.broadcast %107 : vector<16x1xf32> to vector<16x128xf32>
    %111 = arith.subf %101, %110 : vector<16x128xf32>
    %112 = arith.mulf %109, %111 : vector<16x128xf32>
    %cst_53 = arith.constant dense<0.000000e+00> : vector<16xf32>
    %113 = vector.multi_reduction <add>, %112, %cst_53 [1] : vector<16x128xf32> to vector<16xf32>
    %114 = vector.shape_cast %113 : vector<16xf32> to vector<16x1xf32>
    %cst_54 = arith.constant 1.280000e+02 : f32
    %115 = vector.broadcast %cst_54 : f32 to vector<16x1xf32>
    %116 = arith.divf %114, %115 : vector<16x1xf32>
    %117 = vector.broadcast %107 : vector<16x1xf32> to vector<16x128xf32>
    %118 = arith.subf %101, %117 : vector<16x128xf32>
    %cst_55 = arith.constant 9.99999996E-13 : f32
    %119 = vector.broadcast %cst_55 : f32 to vector<16x1xf32>
    %120 = arith.addf %116, %119 : vector<16x1xf32>
    %121 = math.rsqrt %120 : vector<16x1xf32>
    %122 = vector.broadcast %121 : vector<16x1xf32> to vector<16x128xf32>
    %123 = arith.mulf %118, %122 : vector<16x128xf32>
    %124 = vector.broadcast %102 : vector<1x128xf32> to vector<16x128xf32>
    %125 = arith.mulf %123, %124 : vector<16x128xf32>
    %126 = vector.broadcast %103 : vector<1x128xf32> to vector<16x128xf32>
    %127 = arith.addf %125, %126 : vector<16x128xf32>
    %c0_56 = arith.constant 0 : index
    %c0_57 = arith.constant 0 : index
    %128 = vector.load %arg12[%c0_56, %c0_57] : memref<128x256xbf16, #tpu.memory_space<vmem>>, vector<128x256xbf16>
    %129 = arith.truncf %127 : vector<16x128xf32> to vector<16x128xbf16>
    %cst_58 = arith.constant dense<0.000000e+00> : vector<16x256xf32>
    %130 = tpu.matmul %129, %128, %cst_58 {dimension_numbers = #tpu.dot_dimension_numbers<[1], [0], [0], [1], [0, 0, 1, 1], [], []>} : vector<16x128xbf16>, vector<128x256xbf16>, vector<16x256xf32> -> vector<16x256xf32>
    %c0_59 = arith.constant 0 : index
    %c0_60 = arith.constant 0 : index
    %131 = vector.load %arg13[%c0_59, %c0_60] : memref<1x256xf32, #tpu.memory_space<vmem>>, vector<1x256xf32>
    %132 = vector.broadcast %131 : vector<1x256xf32> to vector<16x256xf32>
    %133 = arith.addf %130, %132 : vector<16x256xf32>
    %134 = arith.mulf %133, %133 : vector<16x256xf32>
    %135 = arith.mulf %133, %134 : vector<16x256xf32>
    %cst_61 = arith.constant 4.471500e-02 : f32
    %136 = vector.broadcast %cst_61 : f32 to vector<16x256xf32>
    %137 = arith.mulf %136, %135 : vector<16x256xf32>
    %138 = arith.addf %133, %137 : vector<16x256xf32>
    %cst_62 = arith.constant 0.797884583 : f32
    %139 = vector.broadcast %cst_62 : f32 to vector<16x256xf32>
    %140 = arith.mulf %139, %138 : vector<16x256xf32>
    %141 = math.tanh %140 : vector<16x256xf32>
    %cst_63 = arith.constant 1.000000e+00 : f32
    %142 = vector.broadcast %cst_63 : f32 to vector<16x256xf32>
    %143 = arith.addf %142, %141 : vector<16x256xf32>
    %cst_64 = arith.constant 5.000000e-01 : f32
    %144 = vector.broadcast %cst_64 : f32 to vector<16x256xf32>
    %145 = arith.mulf %144, %143 : vector<16x256xf32>
    %146 = arith.mulf %133, %145 : vector<16x256xf32>
    %c0_65 = arith.constant 0 : index
    %c0_66 = arith.constant 0 : index
    %147 = vector.load %arg14[%c0_65, %c0_66] : memref<256x128xbf16, #tpu.memory_space<vmem>>, vector<256x128xbf16>
    %148 = arith.truncf %146 : vector<16x256xf32> to vector<16x256xbf16>
    %cst_67 = arith.constant dense<0.000000e+00> : vector<16x128xf32>
    %149 = tpu.matmul %148, %147, %cst_67 {dimension_numbers = #tpu.dot_dimension_numbers<[1], [0], [0], [1], [0, 0, 1, 1], [], []>} : vector<16x256xbf16>, vector<256x128xbf16>, vector<16x128xf32> -> vector<16x128xf32>
    %c0_68 = arith.constant 0 : index
    %c0_69 = arith.constant 0 : index
    %150 = vector.load %arg15[%c0_68, %c0_69] : memref<1x128xf32, #tpu.memory_space<vmem>>, vector<1x128xf32>
    %151 = vector.broadcast %150 : vector<1x128xf32> to vector<16x128xf32>
    %152 = arith.addf %149, %151 : vector<16x128xf32>
    %153 = arith.addf %127, %152 : vector<16x128xf32>
    %c0_70 = arith.constant 0 : index
    %c0_71 = arith.constant 0 : index
    %154 = vector.load %arg16[%c0_70, %c0_71] : memref<1x128xf32, #tpu.memory_space<vmem>>, vector<1x128xf32>
    %c0_72 = arith.constant 0 : index
    %c0_73 = arith.constant 0 : index
    %155 = vector.load %arg17[%c0_72, %c0_73] : memref<1x128xf32, #tpu.memory_space<vmem>>, vector<1x128xf32>
    %cst_74 = arith.constant dense<0.000000e+00> : vector<16xf32>
    %156 = vector.multi_reduction <add>, %153, %cst_74 [1] : vector<16x128xf32> to vector<16xf32>
    %157 = vector.shape_cast %156 : vector<16xf32> to vector<16x1xf32>
    %cst_75 = arith.constant 1.280000e+02 : f32
    %158 = vector.broadcast %cst_75 : f32 to vector<16x1xf32>
    %159 = arith.divf %157, %158 : vector<16x1xf32>
    %160 = vector.broadcast %159 : vector<16x1xf32> to vector<16x128xf32>
    %161 = arith.subf %153, %160 : vector<16x128xf32>
    %162 = vector.broadcast %159 : vector<16x1xf32> to vector<16x128xf32>
    %163 = arith.subf %153, %162 : vector<16x128xf32>
    %164 = arith.mulf %161, %163 : vector<16x128xf32>
    %cst_76 = arith.constant dense<0.000000e+00> : vector<16xf32>
    %165 = vector.multi_reduction <add>, %164, %cst_76 [1] : vector<16x128xf32> to vector<16xf32>
    %166 = vector.shape_cast %165 : vector<16xf32> to vector<16x1xf32>
    %cst_77 = arith.constant 1.280000e+02 : f32
    %167 = vector.broadcast %cst_77 : f32 to vector<16x1xf32>
    %168 = arith.divf %166, %167 : vector<16x1xf32>
    %169 = vector.broadcast %159 : vector<16x1xf32> to vector<16x128xf32>
    %170 = arith.subf %153, %169 : vector<16x128xf32>
    %cst_78 = arith.constant 9.99999996E-13 : f32
    %171 = vector.broadcast %cst_78 : f32 to vector<16x1xf32>
    %172 = arith.addf %168, %171 : vector<16x1xf32>
    %173 = math.rsqrt %172 : vector<16x1xf32>
    %174 = vector.broadcast %173 : vector<16x1xf32> to vector<16x128xf32>
    %175 = arith.mulf %170, %174 : vector<16x128xf32>
    %176 = vector.broadcast %154 : vector<1x128xf32> to vector<16x128xf32>
    %177 = arith.mulf %175, %176 : vector<16x128xf32>
    %178 = vector.broadcast %155 : vector<1x128xf32> to vector<16x128xf32>
    %179 = arith.addf %177, %178 : vector<16x128xf32>
    %c0_79 = arith.constant 0 : index
    %c0_80 = arith.constant 0 : index
    %c0_81 = arith.constant 0 : index
    %180 = vector.load %arg18[%c0_79, %c0_80, %c0_81] : memref<1x16x128xf32, #tpu.memory_space<vmem>>, vector<1x16x128xf32>
    %181 = vector.shape_cast %180 : vector<1x16x128xf32> to vector<16x128xf32>
    %182 = vector.shape_cast %179 : vector<16x128xf32> to vector<1x16x128xf32>
    tpu.vector_store %arg18[%c0_79, %c0_80, %c0_81], %182 {strides = array<i32>} : memref<1x16x128xf32, #tpu.memory_space<vmem>>, vector<1x16x128xf32>,
    %c0_82 = arith.constant 0 : index
    %c0_83 = arith.constant 0 : index
    %c0_84 = arith.constant 0 : index
    %183 = vector.load %arg3[%c0_82, %c0_83, %c0_84] : memref<1x4x16xf32, #tpu.memory_space<vmem>>, vector<1x4x16xf32>
    %184 = vector.shape_cast %183 : vector<1x4x16xf32> to vector<4x16xf32>
    %185 = vector.shape_cast %179 : vector<16x128xf32> to vector<1x16x128xf32>
    %cst_85 = arith.constant 1.000000e+00 : f32
    %186 = vector.broadcast %cst_85 : f32 to vector<4x16xf32>
    %187 = arith.subf %184, %186 : vector<4x16xf32>
    %cst_86 = arith.constant 1.000000e+09 : f32
    %188 = vector.broadcast %cst_86 : f32 to vector<4x16xf32>
    %189 = arith.mulf %187, %188 : vector<4x16xf32>
    %190 = vector.shape_cast %189 : vector<4x16xf32> to vector<4x16x1xf32>
    %191 = vector.broadcast %185 : vector<1x16x128xf32> to vector<4x16x128xf32>
    %192 = vector.broadcast %190 : vector<4x16x1xf32> to vector<4x16x128xf32>
    %193 = arith.addf %191, %192 : vector<4x16x128xf32>
    %cst_87 = arith.constant dense<0xFF800000> : vector<4x128xf32>
    %194 = vector.multi_reduction <maximumf>, %193, %cst_87 [1] : vector<4x16x128xf32> to vector<4x128xf32>
    %cst_88 = arith.constant dense<0.000000e+00> : vector<4xf32>
    %195 = vector.multi_reduction <add>, %184, %cst_88 [1] : vector<4x16xf32> to vector<4xf32>
    %196 = vector.shape_cast %195 : vector<4xf32> to vector<4x1xf32>
    %cst_89 = arith.constant 0.000000e+00 : f32
    %197 = vector.broadcast %cst_89 : f32 to vector<4x1xf32>
    %198 = arith.cmpf ogt, %196, %197 : vector<4x1xf32>
    %cst_90 = arith.constant 0.000000e+00 : f32
    %199 = vector.shape_cast %198 : vector<4x1xi1> to vector<4x1xi1>
    %200 = vector.broadcast %199 : vector<4x1xi1> to vector<4x128xi1>
    %201 = vector.broadcast %cst_90 : f32 to vector<4x128xf32>
    %202 = arith.select %200, %194, %201 : vector<4x128xi1>, vector<4x128xf32>
    %203 = vector.shape_cast %202 : vector<4x128xf32> to vector<4x1x128xf32>
    %204 = vector.broadcast %203 : vector<4x1x128xf32> to vector<4x16x128xf32>
    %205 = arith.subf %193, %204 : vector<4x16x128xf32>
    %206 = math.exp %205 : vector<4x16x128xf32>
    %cst_91 = arith.constant dense<0.000000e+00> : vector<4x128xf32>
    %207 = vector.multi_reduction <add>, %206, %cst_91 [1] : vector<4x16x128xf32> to vector<4x128xf32>
    %cst_92 = arith.constant 1.000000e-30 : f32
    %208 = vector.broadcast %cst_92 : f32 to vector<4x128xf32>
    %209 = arith.maximumf %207, %208 : vector<4x128xf32>
    %210 = math.log %209 : vector<4x128xf32>
    %211 = arith.addf %202, %210 : vector<4x128xf32>
    %cst_93 = arith.constant 0.000000e+00 : f32
    %212 = vector.shape_cast %198 : vector<4x1xi1> to vector<4x1xi1>
    %213 = vector.broadcast %212 : vector<4x1xi1> to vector<4x128xi1>
    %214 = vector.broadcast %cst_93 : f32 to vector<4x128xf32>
    %215 = arith.select %213, %211, %214 : vector<4x128xi1>, vector<4x128xf32>
    %c0_94 = arith.constant 0 : index
    %c0_95 = arith.constant 0 : index
    %c0_96 = arith.constant 0 : index
    %216 = vector.load %arg20[%c0_94, %c0_95, %c0_96] : memref<1x4x128xf32, #tpu.memory_space<vmem>>, vector<1x4x128xf32>
    %217 = vector.shape_cast %216 : vector<1x4x128xf32> to vector<4x128xf32>
    %218 = vector.shape_cast %215 : vector<4x128xf32> to vector<1x4x128xf32>
    tpu.vector_store %arg20[%c0_94, %c0_95, %c0_96], %218 {strides = array<i32>} : memref<1x4x128xf32, #tpu.memory_space<vmem>>, vector<1x4x128xf32>,
    return
  }
  func.func @transform_0(%arg0: i32) -> (i32, i32, i32) {
    %c0_i32 = arith.constant 0 : i32
    %c0_i32_0 = arith.constant 0 : i32
    %c0_i32_1 = arith.constant 0 : i32
    return %arg0, %c0_i32, %c0_i32_0 : i32, i32, i32
  }
  func.func @transform_1(%arg0: i32) -> (i32, i32, i32) {
    %c0_i32 = arith.constant 0 : i32
    %c0_i32_0 = arith.constant 0 : i32
    %c0_i32_1 = arith.constant 0 : i32
    return %arg0, %c0_i32, %c0_i32_0 : i32, i32, i32
  }
  func.func @transform_2(%arg0: i32) -> (i32, i32, i32) {
    %c0_i32 = arith.constant 0 : i32
    %c0_i32_0 = arith.constant 0 : i32
    %c0_i32_1 = arith.constant 0 : i32
    return %arg0, %c0_i32, %c0_i32_0 : i32, i32, i32
  }
  func.func @transform_3(%arg0: i32) -> (i32, i32) {
    %c0_i32 = arith.constant 0 : i32
    %c0_i32_0 = arith.constant 0 : i32
    %c0_i32_1 = arith.constant 0 : i32
    return %c0_i32, %c0_i32_0 : i32, i32
  }
  func.func @transform_4(%arg0: i32) -> (i32, i32) {
    %c0_i32 = arith.constant 0 : i32
    %c0_i32_0 = arith.constant 0 : i32
    %c0_i32_1 = arith.constant 0 : i32
    return %c0_i32, %c0_i32_0 : i32, i32
  }
  func.func @transform_5(%arg0: i32) -> (i32, i32) {
    %c0_i32 = arith.constant 0 : i32
    %c0_i32_0 = arith.constant 0 : i32
    %c0_i32_1 = arith.constant 0 : i32
    return %c0_i32, %c0_i32_0 : i32, i32
  }
  func.func @transform_6(%arg0: i32) -> (i32, i32) {
    %c0_i32 = arith.constant 0 : i32
    %c0_i32_0 = arith.constant 0 : i32
    %c0_i32_1 = arith.constant 0 : i32
    return %c0_i32, %c0_i32_0 : i32, i32
  }
  func.func @transform_7(%arg0: i32) -> (i32, i32) {
    %c0_i32 = arith.constant 0 : i32
    %c0_i32_0 = arith.constant 0 : i32
    %c0_i32_1 = arith.constant 0 : i32
    return %c0_i32, %c0_i32_0 : i32, i32
  }
  func.func @transform_8(%arg0: i32) -> (i32, i32) {
    %c0_i32 = arith.constant 0 : i32
    %c0_i32_0 = arith.constant 0 : i32
    %c0_i32_1 = arith.constant 0 : i32
    return %c0_i32, %c0_i32_0 : i32, i32
  }
  func.func @transform_9(%arg0: i32) -> (i32, i32) {
    %c0_i32 = arith.constant 0 : i32
    %c0_i32_0 = arith.constant 0 : i32
    %c0_i32_1 = arith.constant 0 : i32
    return %c0_i32, %c0_i32_0 : i32, i32
  }
  func.func @transform_10(%arg0: i32) -> (i32, i32) {
    %c0_i32 = arith.constant 0 : i32
    %c0_i32_0 = arith.constant 0 : i32
    %c0_i32_1 = arith.constant 0 : i32
    return %c0_i32, %c0_i32_0 : i32, i32
  }
  func.func @transform_11(%arg0: i32) -> (i32, i32) {
    %c0_i32 = arith.constant 0 : i32
    %c0_i32_0 = arith.constant 0 : i32
    %c0_i32_1 = arith.constant 0 : i32
    return %c0_i32, %c0_i32_0 : i32, i32
  }
  func.func @transform_12(%arg0: i32) -> (i32, i32) {
    %c0_i32 = arith.constant 0 : i32
    %c0_i32_0 = arith.constant 0 : i32
    %c0_i32_1 = arith.constant 0 : i32
    return %c0_i32, %c0_i32_0 : i32, i32
  }
  func.func @transform_13(%arg0: i32) -> (i32, i32) {
    %c0_i32 = arith.constant 0 : i32
    %c0_i32_0 = arith.constant 0 : i32
    %c0_i32_1 = arith.constant 0 : i32
    return %c0_i32, %c0_i32_0 : i32, i32
  }
  func.func @transform_14(%arg0: i32) -> (i32, i32) {
    %c0_i32 = arith.constant 0 : i32
    %c0_i32_0 = arith.constant 0 : i32
    %c0_i32_1 = arith.constant 0 : i32
    return %c0_i32, %c0_i32_0 : i32, i32
  }
  func.func @transform_15(%arg0: i32) -> (i32, i32) {
    %c0_i32 = arith.constant 0 : i32
    %c0_i32_0 = arith.constant 0 : i32
    %c0_i32_1 = arith.constant 0 : i32
    return %c0_i32, %c0_i32_0 : i32, i32
  }
  func.func @transform_16(%arg0: i32) -> (i32, i32) {
    %c0_i32 = arith.constant 0 : i32
    %c0_i32_0 = arith.constant 0 : i32
    %c0_i32_1 = arith.constant 0 : i32
    return %c0_i32, %c0_i32_0 : i32, i32
  }
  func.func @transform_17(%arg0: i32) -> (i32, i32, i32) {
    %c0_i32 = arith.constant 0 : i32
    %c0_i32_0 = arith.constant 0 : i32
    %c0_i32_1 = arith.constant 0 : i32
    return %arg0, %c0_i32, %c0_i32_0 : i32, i32, i32
  }
  func.func @transform_18(%arg0: i32) -> (i32, i32, i32, i32) {
    %c0_i32 = arith.constant 0 : i32
    %c0_i32_0 = arith.constant 0 : i32
    %c0_i32_1 = arith.constant 0 : i32
    %c0_i32_2 = arith.constant 0 : i32
    return %arg0, %c0_i32, %c0_i32_0, %c0_i32_1 : i32, i32, i32, i32
  }
  func.func @transform_19(%arg0: i32) -> (i32, i32, i32) {
    %c0_i32 = arith.constant 0 : i32
    %c0_i32_0 = arith.constant 0 : i32
    %c0_i32_1 = arith.constant 0 : i32
    return %arg0, %c0_i32, %c0_i32_0 : i32, i32, i32
  }
}

</mosaic_0001>

<llo_original>
// kernel: model_forward.1
$region0: #{model_forward.1}
  #allocation0 [shape = 'u32[]', space=smem, size = 0x4, offset = 0x4, fixed_abs, tag = 'smem constant byte address 0x4 - core index']
  #allocation1 [shape = 'u32[144,128]{1,0:T(1,128)}', space=vmem, size = 0x12000, scoped, tag = 'internal scratch']
  #allocation2 [shape = 'f32[16,128]{1,0:T(8,128)}', space=vmem, size = 0x2000, scoped, tag = 'scratch operand']
  %s0 = inlined_call_operand.vmem [shape: f32[2,16,128], index: 0, kind: input, shape index: {}]
  %s1 = inlined_call_operand.vmem [shape: f32[2,1,16], index: 1, kind: input, shape index: {}]
  %s2 = inlined_call_operand.vmem [shape: f32[2,4,16], index: 2, kind: input, shape index: {}]
  %s3 = inlined_call_operand.vmem [shape: f32[1,128], index: 3, kind: input, shape index: {}]
  %s4 = inlined_call_operand.vmem [shape: f32[1,128], index: 4, kind: input, shape index: {}]
  %s5 = inlined_call_operand.vmem [shape: bf16[128,384], index: 5, kind: input, shape index: {}]
  %s6 = inlined_call_operand.vmem [shape: f32[1,384], index: 6, kind: input, shape index: {}]
  %s7 = inlined_call_operand.vmem [shape: bf16[128,128], index: 7, kind: input, shape index: {}]
  %s8 = inlined_call_operand.vmem [shape: f32[1,128], index: 8, kind: input, shape index: {}]
  %s9 = inlined_call_operand.vmem [shape: f32[1,128], index: 9, kind: input, shape index: {}]
  %s10 = inlined_call_operand.vmem [shape: f32[1,128], index: 10, kind: input, shape index: {}]
  %s11 = inlined_call_operand.vmem [shape: bf16[128,256], index: 11, kind: input, shape index: {}]
  %s12 = inlined_call_operand.vmem [shape: f32[1,256], index: 12, kind: input, shape index: {}]
  %s13 = inlined_call_operand.vmem [shape: bf16[256,128], index: 13, kind: input, shape index: {}]
  %s14 = inlined_call_operand.vmem [shape: f32[1,128], index: 14, kind: input, shape index: {}]
  %s15 = inlined_call_operand.vmem [shape: f32[1,128], index: 15, kind: input, shape index: {}]
  %s16 = inlined_call_operand.vmem [shape: f32[1,128], index: 16, kind: input, shape index: {}]
  %s17 = inlined_call_operand.hbm [shape: f32[2,16,128], index: 17, kind: output, shape index: {0}]
  %s18 = inlined_call_operand.hbm [shape: f32[2,2,16,16], index: 18, kind: output, shape index: {1}]
  %s19 = inlined_call_operand.hbm [shape: f32[2,4,128], index: 19, kind: output, shape index: {2}]
  %20 = xla_tuple %s17, %s18, %s19
  %s21 = sld [smem:[#allocation0]]
  $region117: #{model_forward.1} parent=0
    _
  %s23 = ssub.s32 1, %s21
  %s24 = scalar_select 0, %s23, %s21
  $region1: #{model_forward.1} parent=0
    #allocation3 [shape = 'u8[16384]{0}', space=vmem, size = 0x4000, scoped, tag = 'output window, operand 0']
    #allocation4 [shape = 's32[2]{0}', space=sflag, size = 0x8, scoped, tag = 'scoped memory for model_forward.1']
    #allocation5 [shape = 'u8[32768]{0}', space=vmem, size = 0x8000, scoped, tag = 'output window, operand 1']
    #allocation6 [shape = 's32[2]{0}', space=sflag, size = 0x8, scoped, tag = 'scoped memory for model_forward.1']
    #allocation7 [shape = 'u8[4096]{0}', space=vmem, size = 0x1000, scoped, tag = 'output window, operand 2']
    %25 = vsyncpa [#allocation4], 0
    %s26 = scalar_lea.sflag [#allocation4], 1
    %27 = vsyncpa %s26, 0
    %28 = vsyncpa [#allocation6], 0
    %s29 = scalar_lea.sflag [#allocation6], 1
    %30 = vsyncpa %s29, 0
    loop: start=0, step=1, limit=4
    $region2: #{model_forward.1} parent=1 // loop_pre_header
      _
    $region3: #{model_forward.1} parent=1 // loop_header
      %s32 = sphi 0, %s36
      %p33 = scmp.ge.s32.totalorder %s32, 4
      %s42 = sphi 0, %s44
      %s45 = sphi 0, %s42
      %s46 = sphi 0, %s45
      %s62 = sphi 0, %s46
      %s68 = sphi 0, %s70
      %s71 = sphi 0, %s68
      %s72 = sphi 0, %s71
      %s88 = sphi 0, %s72
      %s94 = sphi 0, %s96
      %s97 = sphi 0, %s94
      %s98 = sphi 0, %s97
      %s114 = sphi 0, %s98
      %s118 = sphi 0, %s118
      %s120 = sphi 0, %s118
      %s121 = sphi 0, %s120
      %s135 = sphi 0, %s121
      %s139 = sphi 0, %s139
      %s141 = sphi 0, %s139
      %s142 = sphi 0, %s141
      %s156 = sphi 0, %s142
      %s160 = sphi 0, %s160
      %s162 = sphi 0, %s160
      %s163 = sphi 0, %s162
      %s177 = sphi 0, %s163
      %s181 = sphi 0, %s181
      %s183 = sphi 0, %s181
      %s184 = sphi 0, %s183
      %s198 = sphi 0, %s184
      %s202 = sphi 0, %s202
      %s204 = sphi 0, %s202
      %s205 = sphi 0, %s204
      %s219 = sphi 0, %s205
      %s223 = sphi 0, %s223
      %s225 = sphi 0, %s223
      %s226 = sphi 0, %s225
      %s240 = sphi 0, %s226
      %s244 = sphi 0, %s244
      %s246 = sphi 0, %s244
      %s247 = sphi 0, %s246
      %s261 = sphi 0, %s247
      %s265 = sphi 0, %s265
      %s267 = sphi 0, %s265
      %s268 = sphi 0, %s267
      %s282 = sphi 0, %s268
      %s286 = sphi 0, %s286
      %s288 = sphi 0, %s286
      %s289 = sphi 0, %s288
      %s303 = sphi 0, %s289
      %s307 = sphi 0, %s307
      %s309 = sphi 0, %s307
      %s310 = sphi 0, %s309
      %s324 = sphi 0, %s310
      %s328 = sphi 0, %s328
      %s330 = sphi 0, %s328
      %s331 = sphi 0, %s330
      %s345 = sphi 0, %s331
      %s349 = sphi 0, %s349
      %s351 = sphi 0, %s349
      %s352 = sphi 0, %s351
      %s366 = sphi 0, %s352
      %s370 = sphi 0, %s370
      %s372 = sphi 0, %s370
      %s373 = sphi 0, %s372
      %s387 = sphi 0, %s373
      %s391 = sphi 0, %s391
      %s393 = sphi 0, %s391
      %s394 = sphi 0, %s393
      %s408 = sphi 0, %s394
      %s414 = sphi 0, %s416
      %s417 = sphi 0, %s414
      %s418 = sphi 0, %s417
      %s434 = sphi 0, %s418
      %s440 = sphi 0, %s442
      %s443 = sphi 0, %s440
      %s444 = sphi 0, %s443
      %s460 = sphi 0, %s444
      %s466 = sphi 0, %s468
      %s469 = sphi 0, %s466
      %s470 = sphi 0, %s469
      %s486 = sphi 0, %s470
    $region4: #{model_forward.1} parent=1 // loop_header_branch
      %35 = sbr.rel (%p33) target = $region8
    $region5: #{model_forward.1} parent=1 // loop_body
      %s37 = ssub.s32 %s32, 1
      %s38 = ssub.s32 %s32, 2
      %s39 = sadd.s32 %s32, 1
      %s40 = ssub.s32 %s32, %s39
      %p41 = scmp.eq.s32.totalorder %s40, 0
      %s43 = sadd.s32 %s42, 1
      %s44 = scalar_select %p41, %s42, %s43
      %p47 = pneg %p41
      %p48 = scmp.eq.s32.totalorder %s32, 1
      %p49 = por %p47, %p48
      %p50 = scmp.ne.s32.totalorder %s42, %s45
      %p51 = scmp.eq.s32.totalorder %s32, 0
      %p52 = por %p50, %p51
      %p53 = scmp.ne.s32.totalorder %s42, %s45
      %p54 = scmp.eq.s32.totalorder %s37, 1
      %p55 = por %p53, %p54
      %p56 = scmp.ne.s32.totalorder %s45, %s46
      %p57 = scmp.eq.s32.totalorder %s37, 0
      %p58 = por %p56, %p57
      %p59 = scmp.ne.s32.totalorder %s45, %s46
      %p60 = scmp.eq.s32.totalorder %s38, 1
      %p61 = por %p59, %p60
      %p63 = scmp.ne.s32.totalorder %s46, %s62
      %p64 = scmp.eq.s32.totalorder %s38, 0
      %p65 = por %p63, %p64
      %s66 = ssub.s32 %s32, %s39
      %p67 = scmp.eq.s32.totalorder %s66, 0
      %s69 = sadd.s32 %s68, 1
      %s70 = scalar_select %p67, %s68, %s69
      %p73 = pneg %p67
      %p74 = scmp.eq.s32.totalorder %s32, 1
      %p75 = por %p73, %p74
      %p76 = scmp.ne.s32.totalorder %s68, %s71
      %p77 = scmp.eq.s32.totalorder %s32, 0
      %p78 = por %p76, %p77
      %p79 = scmp.ne.s32.totalorder %s68, %s71
      %p80 = scmp.eq.s32.totalorder %s37, 1
      %p81 = por %p79, %p80
      %p82 = scmp.ne.s32.totalorder %s71, %s72
      %p83 = scmp.eq.s32.totalorder %s37, 0
      %p84 = por %p82, %p83
      %p85 = scmp.ne.s32.totalorder %s71, %s72
      %p86 = scmp.eq.s32.totalorder %s38, 1
      %p87 = por %p85, %p86
      %p89 = scmp.ne.s32.totalorder %s72, %s88
      %p90 = scmp.eq.s32.totalorder %s38, 0
      %p91 = por %p89, %p90
      %s92 = ssub.s32 %s32, %s39
      %p93 = scmp.eq.s32.totalorder %s92, 0
      %s95 = sadd.s32 %s94, 1
      %s96 = scalar_select %p93, %s94, %s95
      %p99 = pneg %p93
      %p100 = scmp.eq.s32.totalorder %s32, 1
      %p101 = por %p99, %p100
      %p102 = scmp.ne.s32.totalorder %s94, %s97
      %p103 = scmp.eq.s32.totalorder %s32, 0
      %p104 = por %p102, %p103
      %p105 = scmp.ne.s32.totalorder %s94, %s97
      %p106 = scmp.eq.s32.totalorder %s37, 1
      %p107 = por %p105, %p106
      %p108 = scmp.ne.s32.totalorder %s97, %s98
      %p109 = scmp.eq.s32.totalorder %s37, 0
      %p110 = por %p108, %p109
      %p111 = scmp.ne.s32.totalorder %s97, %s98
      %p112 = scmp.eq.s32.totalorder %s38, 1
      %p113 = por %p111, %p112
      %p115 = scmp.ne.s32.totalorder %s98, %s114
      %p116 = scmp.eq.s32.totalorder %s38, 0
      %p117 = por %p115, %p116
      %s119 = sadd.s32 %s118, 1
      %p122 = scmp.eq.s32.totalorder %s32, 1
      %p123 = scmp.ne.s32.totalorder %s118, %s120
      %p124 = scmp.eq.s32.totalorder %s32, 0
      %p125 = por %p123, %p124
      %p126 = scmp.ne.s32.totalorder %s118, %s120
      %p127 = scmp.eq.s32.totalorder %s37, 1
      %p128 = por %p126, %p127
      %p129 = scmp.ne.s32.totalorder %s120, %s121
      %p130 = scmp.eq.s32.totalorder %s37, 0
      %p131 = por %p129, %p130
      %p132 = scmp.ne.s32.totalorder %s120, %s121
      %p133 = scmp.eq.s32.totalorder %s38, 1
      %p134 = por %p132, %p133
      %p136 = scmp.ne.s32.totalorder %s121, %s135
      %p137 = scmp.eq.s32.totalorder %s38, 0
      %p138 = por %p136, %p137
      %s140 = sadd.s32 %s139, 1
      %p143 = scmp.eq.s32.totalorder %s32, 1
      %p144 = scmp.ne.s32.totalorder %s139, %s141
      %p145 = scmp.eq.s32.totalorder %s32, 0
      %p146 = por %p144, %p145
      %p147 = scmp.ne.s32.totalorder %s139, %s141
      %p148 = scmp.eq.s32.totalorder %s37, 1
      %p149 = por %p147, %p148
      %p150 = scmp.ne.s32.totalorder %s141, %s142
      %p151 = scmp.eq.s32.totalorder %s37, 0
      %p152 = por %p150, %p151
      %p153 = scmp.ne.s32.totalorder %s141, %s142
      %p154 = scmp.eq.s32.totalorder %s38, 1
      %p155 = por %p153, %p154
      %p157 = scmp.ne.s32.totalorder %s142, %s156
      %p158 = scmp.eq.s32.totalorder %s38, 0
      %p159 = por %p157, %p158
      %s161 = sadd.s32 %s160, 1
      %p164 = scmp.eq.s32.totalorder %s32, 1
      %p165 = scmp.ne.s32.totalorder %s160, %s162
      %p166 = scmp.eq.s32.totalorder %s32, 0
      %p167 = por %p165, %p166
      %p168 = scmp.ne.s32.totalorder %s160, %s162
      %p169 = scmp.eq.s32.totalorder %s37, 1
      %p170 = por %p168, %p169
      %p171 = scmp.ne.s32.totalorder %s162, %s163
      %p172 = scmp.eq.s32.totalorder %s37, 0
      %p173 = por %p171, %p172
      %p174 = scmp.ne.s32.totalorder %s162, %s163
      %p175 = scmp.eq.s32.totalorder %s38, 1
      %p176 = por %p174, %p175
      %p178 = scmp.ne.s32.totalorder %s163, %s177
      %p179 = scmp.eq.s32.totalorder %s38, 0
      %p180 = por %p178, %p179
      %s182 = sadd.s32 %s181, 1
      %p185 = scmp.eq.s32.totalorder %s32, 1
      %p186 = scmp.ne.s32.totalorder %s181, %s183
      %p187 = scmp.eq.s32.totalorder %s32, 0
      %p188 = por %p186, %p187
      %p189 = scmp.ne.s32.totalorder %s181, %s183
      %p190 = scmp.eq.s32.totalorder %s37, 1
      %p191 = por %p189, %p190
      %p192 = scmp.ne.s32.totalorder %s183, %s184
      %p193 = scmp.eq.s32.totalorder %s37, 0
      %p194 = por %p192, %p193
      %p195 = scmp.ne.s32.totalorder %s183, %s184
      %p196 = scmp.eq.s32.totalorder %s38, 1
      %p197 = por %p195, %p196
      %p199 = scmp.ne.s32.totalorder %s184, %s198
      %p200 = scmp.eq.s32.totalorder %s38, 0
      %p201 = por %p199, %p200
      %s203 = sadd.s32 %s202, 1
      %p206 = scmp.eq.s32.totalorder %s32, 1
      %p207 = scmp.ne.s32.totalorder %s202, %s204
      %p208 = scmp.eq.s32.totalorder %s32, 0
      %p209 = por %p207, %p208
      %p210 = scmp.ne.s32.totalorder %s202, %s204
      %p211 = scmp.eq.s32.totalorder %s37, 1
      %p212 = por %p210, %p211
      %p213 = scmp.ne.s32.totalorder %s204, %s205
      %p214 = scmp.eq.s32.totalorder %s37, 0
      %p215 = por %p213, %p214
      %p216 = scmp.ne.s32.totalorder %s204, %s205
      %p217 = scmp.eq.s32.totalorder %s38, 1
      %p218 = por %p216, %p217
      %p220 = scmp.ne.s32.totalorder %s205, %s219
      %p221 = scmp.eq.s32.totalorder %s38, 0
      %p222 = por %p220, %p221
      %s224 = sadd.s32 %s223, 1
      %p227 = scmp.eq.s32.totalorder %s32, 1
      %p228 = scmp.ne.s32.totalorder %s223, %s225
      %p229 = scmp.eq.s32.totalorder %s32, 0
      %p230 = por %p228, %p229
      %p231 = scmp.ne.s32.totalorder %s223, %s225
      %p232 = scmp.eq.s32.totalorder %s37, 1
      %p233 = por %p231, %p232
      %p234 = scmp.ne.s32.totalorder %s225, %s226
      %p235 = scmp.eq.s32.totalorder %s37, 0
      %p236 = por %p234, %p235
      %p237 = scmp.ne.s32.totalorder %s225, %s226
      %p238 = scmp.eq.s32.totalorder %s38, 1
      %p239 = por %p237, %p238
      %p241 = scmp.ne.s32.totalorder %s226, %s240
      %p242 = scmp.eq.s32.totalorder %s38, 0
      %p243 = por %p241, %p242
      %s245 = sadd.s32 %s244, 1
      %p248 = scmp.eq.s32.totalorder %s32, 1
      %p249 = scmp.ne.s32.totalorder %s244, %s246
      %p250 = scmp.eq.s32.totalorder %s32, 0
      %p251 = por %p249, %p250
      %p252 = scmp.ne.s32.totalorder %s244, %s246
      %p253 = scmp.eq.s32.totalorder %s37, 1
      %p254 = por %p252, %p253
      %p255 = scmp.ne.s32.totalorder %s246, %s247
      %p256 = scmp.eq.s32.totalorder %s37, 0
      %p257 = por %p255, %p256
      %p258 = scmp.ne.s32.totalorder %s246, %s247
      %p259 = scmp.eq.s32.totalorder %s38, 1
      %p260 = por %p258, %p259
      %p262 = scmp.ne.s32.totalorder %s247, %s261
      %p263 = scmp.eq.s32.totalorder %s38, 0
      %p264 = por %p262, %p263
      %s266 = sadd.s32 %s265, 1
      %p269 = scmp.eq.s32.totalorder %s32, 1
      %p270 = scmp.ne.s32.totalorder %s265, %s267
      %p271 = scmp.eq.s32.totalorder %s32, 0
      %p272 = por %p270, %p271
      %p273 = scmp.ne.s32.totalorder %s265, %s267
      %p274 = scmp.eq.s32.totalorder %s37, 1
      %p275 = por %p273, %p274
      %p276 = scmp.ne.s32.totalorder %s267, %s268
      %p277 = scmp.eq.s32.totalorder %s37, 0
      %p278 = por %p276, %p277
      %p279 = scmp.ne.s32.totalorder %s267, %s268
      %p280 = scmp.eq.s32.totalorder %s38, 1
      %p281 = por %p279, %p280
      %p283 = scmp.ne.s32.totalorder %s268, %s282
      %p284 = scmp.eq.s32.totalorder %s38, 0
      %p285 = por %p283, %p284
      %s287 = sadd.s32 %s286, 1
      %p290 = scmp.eq.s32.totalorder %s32, 1
      %p291 = scmp.ne.s32.totalorder %s286, %s288
      %p292 = scmp.eq.s32.totalorder %s32, 0
      %p293 = por %p291, %p292
      %p294 = scmp.ne.s32.totalorder %s286, %s288
      %p295 = scmp.eq.s32.totalorder %s37, 1
      %p296 = por %p294, %p295
      %p297 = scmp.ne.s32.totalorder %s288, %s289
      %p298 = scmp.eq.s32.totalorder %s37, 0
      %p299 = por %p297, %p298
      %p300 = scmp.ne.s32.totalorder %s288, %s289
      %p301 = scmp.eq.s32.totalorder %s38, 1
      %p302 = por %p300, %p301
      %p304 = scmp.ne.s32.totalorder %s289, %s303
      %p305 = scmp.eq.s32.totalorder %s38, 0
      %p306 = por %p304, %p305
      %s308 = sadd.s32 %s307, 1
      %p311 = scmp.eq.s32.totalorder %s32, 1
      %p312 = scmp.ne.s32.totalorder %s307, %s309
      %p313 = scmp.eq.s32.totalorder %s32, 0
      %p314 = por %p312, %p313
      %p315 = scmp.ne.s32.totalorder %s307, %s309
      %p316 = scmp.eq.s32.totalorder %s37, 1
      %p317 = por %p315, %p316
      %p318 = scmp.ne.s32.totalorder %s309, %s310
      %p319 = scmp.eq.s32.totalorder %s37, 0
      %p320 = por %p318, %p319
      %p321 = scmp.ne.s32.totalorder %s309, %s310
      %p322 = scmp.eq.s32.totalorder %s38, 1
      %p323 = por %p321, %p322
      %p325 = scmp.ne.s32.totalorder %s310, %s324
      %p326 = scmp.eq.s32.totalorder %s38, 0
      %p327 = por %p325, %p326
      %s329 = sadd.s32 %s328, 1
      %p332 = scmp.eq.s32.totalorder %s32, 1
      %p333 = scmp.ne.s32.totalorder %s328, %s330
      %p334 = scmp.eq.s32.totalorder %s32, 0
      %p335 = por %p333, %p334
      %p336 = scmp.ne.s32.totalorder %s328, %s330
      %p337 = scmp.eq.s32.totalorder %s37, 1
      %p338 = por %p336, %p337
      %p339 = scmp.ne.s32.totalorder %s330, %s331
      %p340 = scmp.eq.s32.totalorder %s37, 0
      %p341 = por %p339, %p340
      %p342 = scmp.ne.s32.totalorder %s330, %s331
      %p343 = scmp.eq.s32.totalorder %s38, 1
      %p344 = por %p342, %p343
      %p346 = scmp.ne.s32.totalorder %s331, %s345
      %p347 = scmp.eq.s32.totalorder %s38, 0
      %p348 = por %p346, %p347
      %s350 = sadd.s32 %s349, 1
      %p353 = scmp.eq.s32.totalorder %s32, 1
      %p354 = scmp.ne.s32.totalorder %s349, %s351
      %p355 = scmp.eq.s32.totalorder %s32, 0
      %p356 = por %p354, %p355
      %p357 = scmp.ne.s32.totalorder %s349, %s351
      %p358 = scmp.eq.s32.totalorder %s37, 1
      %p359 = por %p357, %p358
      %p360 = scmp.ne.s32.totalorder %s351, %s352
      %p361 = scmp.eq.s32.totalorder %s37, 0
      %p362 = por %p360, %p361
      %p363 = scmp.ne.s32.totalorder %s351, %s352
      %p364 = scmp.eq.s32.totalorder %s38, 1
      %p365 = por %p363, %p364
      %p367 = scmp.ne.s32.totalorder %s352, %s366
      %p368 = scmp.eq.s32.totalorder %s38, 0
      %p369 = por %p367, %p368
      %s371 = sadd.s32 %s370, 1
      %p374 = scmp.eq.s32.totalorder %s32, 1
      %p375 = scmp.ne.s32.totalorder %s370, %s372
      %p376 = scmp.eq.s32.totalorder %s32, 0
      %p377 = por %p375, %p376
      %p378 = scmp.ne.s32.totalorder %s370, %s372
      %p379 = scmp.eq.s32.totalorder %s37, 1
      %p380 = por %p378, %p379
      %p381 = scmp.ne.s32.totalorder %s372, %s373
      %p382 = scmp.eq.s32.totalorder %s37, 0
      %p383 = por %p381, %p382
      %p384 = scmp.ne.s32.totalorder %s372, %s373
      %p385 = scmp.eq.s32.totalorder %s38, 1
      %p386 = por %p384, %p385
      %p388 = scmp.ne.s32.totalorder %s373, %s387
      %p389 = scmp.eq.s32.totalorder %s38, 0
      %p390 = por %p388, %p389
      %s392 = sadd.s32 %s391, 1
      %p395 = scmp.eq.s32.totalorder %s32, 1
      %p396 = scmp.ne.s32.totalorder %s391, %s393
      %p397 = scmp.eq.s32.totalorder %s32, 0
      %p398 = por %p396, %p397
      %p399 = scmp.ne.s32.totalorder %s391, %s393
      %p400 = scmp.eq.s32.totalorder %s37, 1
      %p401 = por %p399, %p400
      %p402 = scmp.ne.s32.totalorder %s393, %s394
      %p403 = scmp.eq.s32.totalorder %s37, 0
      %p404 = por %p402, %p403
      %p405 = scmp.ne.s32.totalorder %s393, %s394
      %p406 = scmp.eq.s32.totalorder %s38, 1
      %p407 = por %p405, %p406
      %p409 = scmp.ne.s32.totalorder %s394, %s408
      %p410 = scmp.eq.s32.totalorder %s38, 0
      %p411 = por %p409, %p410
      %s412 = ssub.s32 %s32, %s39
      %p413 = scmp.eq.s32.totalorder %s412, 0
      %s415 = sadd.s32 %s414, 1
      %s416 = scalar_select %p413, %s414, %s415
      %p419 = pneg %p413
      %p420 = scmp.eq.s32.totalorder %s32, 1
      %p421 = por %p419, %p420
      %p422 = scmp.ne.s32.totalorder %s414, %s417
      %p423 = scmp.eq.s32.totalorder %s32, 0
      %p424 = por %p422, %p423
      %p425 = scmp.ne.s32.totalorder %s414, %s417
      %p426 = scmp.eq.s32.totalorder %s37, 1
      %p427 = por %p425, %p426
      %p428 = scmp.ne.s32.totalorder %s417, %s418
      %p429 = scmp.eq.s32.totalorder %s37, 0
      %p430 = por %p428, %p429
      %p431 = scmp.ne.s32.totalorder %s417, %s418
      %p432 = scmp.eq.s32.totalorder %s38, 1
      %p433 = por %p431, %p432
      %p435 = scmp.ne.s32.totalorder %s418, %s434
      %p436 = scmp.eq.s32.totalorder %s38, 0
      %p437 = por %p435, %p436
      %s438 = ssub.s32 %s32, %s39
      %p439 = scmp.eq.s32.totalorder %s438, 0
      %s441 = sadd.s32 %s440, 1
      %s442 = scalar_select %p439, %s440, %s441
      %p445 = pneg %p439
      %p446 = scmp.eq.s32.totalorder %s32, 1
      %p447 = por %p445, %p446
      %p448 = scmp.ne.s32.totalorder %s440, %s443
      %p449 = scmp.eq.s32.totalorder %s32, 0
      %p450 = por %p448, %p449
      %p451 = scmp.ne.s32.totalorder %s440, %s443
      %p452 = scmp.eq.s32.totalorder %s37, 1
      %p453 = por %p451, %p452
      %p454 = scmp.ne.s32.totalorder %s443, %s444
      %p455 = scmp.eq.s32.totalorder %s37, 0
      %p456 = por %p454, %p455
      %p457 = scmp.ne.s32.totalorder %s443, %s444
      %p458 = scmp.eq.s32.totalorder %s38, 1
      %p459 = por %p457, %p458
      %p461 = scmp.ne.s32.totalorder %s444, %s460
      %p462 = scmp.eq.s32.totalorder %s38, 0
      %p463 = por %p461, %p462
      %s464 = ssub.s32 %s32, %s39
      %p465 = scmp.eq.s32.totalorder %s464, 0
      %s467 = sadd.s32 %s466, 1
      %s468 = scalar_select %p465, %s466, %s467
      %p471 = pneg %p465
      %p472 = scmp.eq.s32.totalorder %s32, 1
      %p473 = por %p471, %p472
      %p474 = scmp.ne.s32.totalorder %s466, %s469
      %p475 = scmp.eq.s32.totalorder %s32, 0
      %p476 = por %p474, %p475
      %p477 = scmp.ne.s32.totalorder %s466, %s469
      %p478 = scmp.eq.s32.totalorder %s37, 1
      %p479 = por %p477, %p478
      %p480 = scmp.ne.s32.totalorder %s469, %s470
      %p481 = scmp.eq.s32.totalorder %s37, 0
      %p482 = por %p480, %p481
      %p483 = scmp.ne.s32.totalorder %s469, %s470
      %p484 = scmp.eq.s32.totalorder %s38, 1
      %p485 = por %p483, %p484
      %p487 = scmp.ne.s32.totalorder %s470, %s486
      %p488 = scmp.eq.s32.totalorder %s38, 0
      %p489 = por %p487, %p488
      %p490 = scmp.le.s32.totalorder 1, %s32
      %p491 = scmp.lt.s32.totalorder %s32, 3
      %p492 = pnand %p490, %p491
      %p493 = pneg %p492
      // Predicated region
      $region9: #{model_forward.1} parent=5 // pred_check
        _
      $region10: #{model_forward.1} parent=5 // pred_check_branch
        %495 = sbr.rel (%p492) target = $region12
      $region11: #{model_forward.1} parent=5 // pred_region
        %s496 = ssub.s32 %s32, 1
        // Predicated region
        $region13: #{model_forward.1} parent=11 // pred_check
          %p497 = pneg %p131
        $region14: #{model_forward.1} parent=11 // pred_check_branch
          %499 = sbr.rel (%p497) target = $region16
        $region15: #{model_forward.1} parent=11 // pred_region
          _
        $region16: #{model_forward.1} parent=11 // pred_fallthru
          _
        // Predicated region
        $region17: #{model_forward.1} parent=11 // pred_check
          %p500 = pneg %p152
        $region18: #{model_forward.1} parent=11 // pred_check_branch
          %502 = sbr.rel (%p500) target = $region20
        $region19: #{model_forward.1} parent=11 // pred_region
          _
        $region20: #{model_forward.1} parent=11 // pred_fallthru
          _
        // Predicated region
        $region21: #{model_forward.1} parent=11 // pred_check
          %p503 = pneg %p173
        $region22: #{model_forward.1} parent=11 // pred_check_branch
          %505 = sbr.rel (%p503) target = $region24
        $region23: #{model_forward.1} parent=11 // pred_region
          _
        $region24: #{model_forward.1} parent=11 // pred_fallthru
          _
        // Predicated region
        $region25: #{model_forward.1} parent=11 // pred_check
          %p506 = pneg %p194
        $region26: #{model_forward.1} parent=11 // pred_check_branch
          %508 = sbr.rel (%p506) target = $region28
        $region27: #{model_forward.1} parent=11 // pred_region
          _
        $region28: #{model_forward.1} parent=11 // pred_fallthru
          _
        // Predicated region
        $region29: #{model_forward.1} parent=11 // pred_check
          %p509 = pneg %p215
        $region30: #{model_forward.1} parent=11 // pred_check_branch
          %511 = sbr.rel (%p509) target = $region32
        $region31: #{model_forward.1} parent=11 // pred_region
          _
        $region32: #{model_forward.1} parent=11 // pred_fallthru
          _
        // Predicated region
        $region33: #{model_forward.1} parent=11 // pred_check
          %p512 = pneg %p236
        $region34: #{model_forward.1} parent=11 // pred_check_branch
          %514 = sbr.rel (%p512) target = $region36
        $region35: #{model_forward.1} parent=11 // pred_region
          _
        $region36: #{model_forward.1} parent=11 // pred_fallthru
          _
        // Predicated region
        $region37: #{model_forward.1} parent=11 // pred_check
          %p515 = pneg %p257
        $region38: #{model_forward.1} parent=11 // pred_check_branch
          %517 = sbr.rel (%p515) target = $region40
        $region39: #{model_forward.1} parent=11 // pred_region
          _
        $region40: #{model_forward.1} parent=11 // pred_fallthru
          _
        // Predicated region
        $region41: #{model_forward.1} parent=11 // pred_check
          %p518 = pneg %p278
        $region42: #{model_forward.1} parent=11 // pred_check_branch
          %520 = sbr.rel (%p518) target = $region44
        $region43: #{model_forward.1} parent=11 // pred_region
          _
        $region44: #{model_forward.1} parent=11 // pred_fallthru
          _
        // Predicated region
        $region45: #{model_forward.1} parent=11 // pred_check
          %p521 = pneg %p299
        $region46: #{model_forward.1} parent=11 // pred_check_branch
          %523 = sbr.rel (%p521) target = $region48
        $region47: #{model_forward.1} parent=11 // pred_region
          _
        $region48: #{model_forward.1} parent=11 // pred_fallthru
          _
        // Predicated region
        $region49: #{model_forward.1} parent=11 // pred_check
          %p524 = pneg %p320
        $region50: #{model_forward.1} parent=11 // pred_check_branch
          %526 = sbr.rel (%p524) target = $region52
        $region51: #{model_forward.1} parent=11 // pred_region
          _
        $region52: #{model_forward.1} parent=11 // pred_fallthru
          _
        // Predicated region
        $region53: #{model_forward.1} parent=11 // pred_check
          %p527 = pneg %p341
        $region54: #{model_forward.1} parent=11 // pred_check_branch
          %529 = sbr.rel (%p527) target = $region56
        $region55: #{model_forward.1} parent=11 // pred_region
          _
        $region56: #{model_forward.1} parent=11 // pred_fallthru
          _
        // Predicated region
        $region57: #{model_forward.1} parent=11 // pred_check
          %p530 = pneg %p362
        $region58: #{model_forward.1} parent=11 // pred_check_branch
          %532 = sbr.rel (%p530) target = $region60
        $region59: #{model_forward.1} parent=11 // pred_region
          _
        $region60: #{model_forward.1} parent=11 // pred_fallthru
          _
        // Predicated region
        $region61: #{model_forward.1} parent=11 // pred_check
          %p533 = pneg %p383
        $region62: #{model_forward.1} parent=11 // pred_check_branch
          %535 = sbr.rel (%p533) target = $region64
        $region63: #{model_forward.1} parent=11 // pred_region
          _
        $region64: #{model_forward.1} parent=11 // pred_fallthru
          _
        // Predicated region
        $region65: #{model_forward.1} parent=11 // pred_check
          %p536 = pneg %p404
        $region66: #{model_forward.1} parent=11 // pred_check_branch
          %538 = sbr.rel (%p536) target = $region68
        $region67: #{model_forward.1} parent=11 // pred_region
          _
        $region68: #{model_forward.1} parent=11 // pred_fallthru
          _
      $region12: #{model_forward.1} parent=5 // pred_fallthru
        _
      %p539 = scmp.lt.s32.totalorder %s32, 2
      // Predicated region
      $region69: #{model_forward.1} parent=5 // pred_check
        %p540 = pneg %p539
      $region70: #{model_forward.1} parent=5 // pred_check_branch
        %542 = sbr.rel (%p540) target = $region72
      $region71: #{model_forward.1} parent=5 // pred_region
        // Predicated region
        $region73: #{model_forward.1} parent=71 // pred_check
          %p543 = pneg %p52
        $region74: #{model_forward.1} parent=71 // pred_check_branch
          %545 = sbr.rel (%p543) target = $region76
        $region75: #{model_forward.1} parent=71 // pred_region
          %p546 = scmp.lt.s32.totalorder %s32, 1
          %s547 = scalar_select %p546, %s32, 1
          %s548 = smul.addr %s547, 2
          %s549 = smul.addr %s548, 8
          %s550 = scalar_lea.vmem %s0, %s549
        $region76: #{model_forward.1} parent=71 // pred_fallthru
          _
        // Predicated region
        $region77: #{model_forward.1} parent=71 // pred_check
          %p551 = pneg %p78
        $region78: #{model_forward.1} parent=71 // pred_check_branch
          %553 = sbr.rel (%p551) target = $region80
        $region79: #{model_forward.1} parent=71 // pred_region
          %p554 = scmp.lt.s32.totalorder %s32, 1
          %s555 = scalar_select %p554, %s32, 1
          %s556 = scalar_lea.vmem %s1, %s555
        $region80: #{model_forward.1} parent=71 // pred_fallthru
          _
        // Predicated region
        $region81: #{model_forward.1} parent=71 // pred_check
          %p557 = pneg %p104
        $region82: #{model_forward.1} parent=71 // pred_check_branch
          %559 = sbr.rel (%p557) target = $region84
        $region83: #{model_forward.1} parent=71 // pred_region
          %p560 = scmp.lt.s32.totalorder %s32, 1
          %s561 = scalar_select %p560, %s32, 1
          %s562 = smul.addr %s561, 4
          %s563 = scalar_lea.vmem %s2, %s562
        $region84: #{model_forward.1} parent=71 // pred_fallthru
          _
      $region72: #{model_forward.1} parent=5 // pred_fallthru
        _
      %p564 = scmp.le.s32.totalorder 1, %s32
      %p565 = scmp.lt.s32.totalorder %s32, 3
      %p566 = pnand %p564, %p565
      %p567 = pneg %p566
      // Predicated region
      $region85: #{model_forward.1} parent=5 // pred_check
        _
      $region86: #{model_forward.1} parent=5 // pred_check_branch
        %569 = sbr.rel (%p566) target = $region88
      $region87: #{model_forward.1} parent=5 // pred_region
        %s570 = ssub.s32 %s32, 1
        %p571 = scmp.lt.s32.totalorder %s37, 1
        %s572 = scalar_select %p571, %s37, 1
        %s573 = smul.addr %s572, 2
        %s574 = smul.addr %s573, 8
        %s575 = scalar_lea.vmem %s0, %s574
        %p576 = pneg %p58
        %p577 = pneg %p55
        %p578 = scmp.lt.s32.totalorder %s37, 1
        %s579 = scalar_select %p578, %s37, 1
        %s580 = scalar_lea.vmem %s1, %s579
        %p581 = pneg %p84
        %p582 = pneg %p81
        %p583 = scmp.lt.s32.totalorder %s37, 1
        %s584 = scalar_select %p583, %s37, 1
        %s585 = smul.addr %s584, 4
        %s586 = scalar_lea.vmem %s2, %s585
        %p587 = pneg %p110
        %p588 = pneg %p107
        %p589 = pneg %p131
        %p590 = pneg %p128
        %p591 = pneg %p152
        %p592 = pneg %p149
        %p593 = pneg %p173
        %p594 = pneg %p170
        %p595 = pneg %p194
        %p596 = pneg %p191
        %p597 = pneg %p215
        %p598 = pneg %p212
        %p599 = pneg %p236
        %p600 = pneg %p233
        %p601 = pneg %p257
        %p602 = pneg %p254
        %p603 = pneg %p278
        %p604 = pneg %p275
        %p605 = pneg %p299
        %p606 = pneg %p296
        %p607 = pneg %p320
        %p608 = pneg %p317
        %p609 = pneg %p341
        %p610 = pneg %p338
        %p611 = pneg %p362
        %p612 = pneg %p359
        %p613 = pneg %p383
        %p614 = pneg %p380
        %p615 = pneg %p404
        %p616 = pneg %p401
        %p617 = pneg %p430
        %p618 = pneg %p427
        %s619 = sand.u32 %s417, 1
        %s620 = scalar_lea.sflag [#allocation4], %s619
        %s621 = sand.u32 %s417, 1
        %s622 = smul.addr %s621, 16
        %s623 = scalar_lea.vmem [#allocation3], %s622
        %p624 = pneg %p456
        %p625 = pneg %p453
        %s626 = sand.u32 %s37, 1
        %s627 = scalar_lea.sflag [#allocation6], %s626
        %s628 = sand.u32 %s443, 1
        %s629 = smul.addr %s628, 32
        %s630 = scalar_lea.vmem [#allocation5], %s629
        %p631 = pneg %p482
        %p632 = pneg %p479
        %s633 = sand.u32 %s37, 1
        %s634 = scalar_lea.sflag [#allocation6], %s633
        %s635 = sand.u32 %s469, 1
        %s636 = smul.addr %s635, 4
        %s637 = scalar_lea.vmem [#allocation7], %s636
        %p638 = scmp.lt.s32.totalorder %s37, 1
        %s639 = scalar_select %p638, %s37, 1
        %s640 = smul.addr %s639, 2
        %s641 = smul.addr %s640, 8
        %s642 = scalar_lea.vmem %s0, %s641
        %p643 = scmp.lt.s32.totalorder %s37, 1
        %s644 = scalar_select %p643, %s37, 1
        %s645 = scalar_lea.vmem %s1, %s644
        %p646 = scmp.lt.s32.totalorder %s37, 1
        %s647 = scalar_select %p646, %s37, 1
        %s648 = smul.addr %s647, 4
        %s649 = scalar_lea.vmem %s2, %s648
        %v651 = vld [vmem:[%s642] sm:$0xff]
        %v652 = vld [vmem:[%s642 + $0x8] sm:$0xff]
        %v653 = vld [vmem:[%s3] sm:$0x1]
        %v654 = vld [vmem:[%s4] sm:$0x1]
        %655 = vadd.xlane.f32.xlu0 %v651
        %v656 = vpop.xlane.xlu0 %655
        %657 = vadd.xlane.f32.xlu0 %v652
        %v658 = vpop.xlane.xlu0 %657
        %v659 = vrcp.pop 128.0
        %v660 = vmul.f32 %v656, %v659
        %v661 = vmul.f32 %v658, %v659
        %v662 = vsub.f32 %v651, %v660
        %v663 = vsub.f32 %v652, %v661
        %v664 = vmul.f32 %v662, %v662
        %v665 = vmul.f32 %v663, %v663
        %666 = vadd.xlane.f32.xlu0 %v664
        %v667 = vpop.xlane.xlu0 %666
        %668 = vadd.xlane.f32.xlu0 %v665
        %v669 = vpop.xlane.xlu0 %668
        %v670 = vmul.f32 %v667, %v659
        %v671 = vmul.f32 %v669, %v659
        %v672 = vadd.f32 %v670, 1e-12
        %v673 = vadd.f32 %v671, 1e-12
        %v674 = vrsqrt.pop %v672
        %v675 = vrsqrt.pop %v673
        %v676 = vmul.f32 %v662, %v674
        %v677 = vmul.f32 %v663, %v675
        %v679 = vlaneseq
        %v680 = vshrl.u32 %v679, 7
        %v681 = vsub.s32 0, %v680
        %v682 = vrot.slane %v653, %v681
        %v684 = vmul.f32 %v676, %v682
        %v685 = vmul.f32 %v677, %v682
        %v687 = vlaneseq
        %v688 = vshrl.u32 %v687, 7
        %v689 = vsub.s32 0, %v688
        %v690 = vrot.slane %v654, %v689
        %v692 = vadd.f32 %v684, %v690
        %v693 = vadd.f32 %v685, %v690
        %v694 = vld [vmem:[%s5] sm:$0xff]
        %v695 = vld [vmem:[%s5 + $0x8] sm:$0xf]
        %v696 = vld [vmem:[%s5 + $0xc] sm:$0xff]
        %v697 = vld [vmem:[%s5 + $0x14] sm:$0xf]
        %v698 = vld [vmem:[%s5 + $0x18] sm:$0xff]
        %v699 = vld [vmem:[%s5 + $0x20] sm:$0xf]
        %v700 = vld [vmem:[%s5 + $0x24] sm:$0xff]
        %v701 = vld [vmem:[%s5 + $0x2c] sm:$0xf]
        %v702 = vld [vmem:[%s5 + $0x30] sm:$0xff]
        %v703 = vld [vmem:[%s5 + $0x38] sm:$0xf]
        %v704 = vld [vmem:[%s5 + $0x3c] sm:$0xff]
        %v705 = vld [vmem:[%s5 + $0x44] sm:$0xf]
        %v706 = vld [vmem:[%s5 + $0x48] sm:$0xff]
        %v707 = vld [vmem:[%s5 + $0x50] sm:$0xf]
        %v708 = vld [vmem:[%s5 + $0x54] sm:$0xff]
        %v709 = vld [vmem:[%s5 + $0x5c] sm:$0xf]
        %v710 = vld [vmem:[%s5 + $0x60] sm:$0xff]
        %v711 = vld [vmem:[%s5 + $0x68] sm:$0xf]
        %v712 = vld [vmem:[%s5 + $0x6c] sm:$0xff]
        %v713 = vld [vmem:[%s5 + $0x74] sm:$0xf]
        %v714 = vld [vmem:[%s5 + $0x78] sm:$0xff]
        %v715 = vld [vmem:[%s5 + $0x80] sm:$0xf]
        %v716 = vld [vmem:[%s5 + $0x84] sm:$0xff]
        %v717 = vld [vmem:[%s5 + $0x8c] sm:$0xf]
        %v718 = vld [vmem:[%s5 + $0x90] sm:$0xff]
        %v719 = vld [vmem:[%s5 + $0x98] sm:$0xf]
        %v720 = vld [vmem:[%s5 + $0x9c] sm:$0xff]
        %v721 = vld [vmem:[%s5 + $0xa4] sm:$0xf]
        %v722 = vld [vmem:[%s5 + $0xa8] sm:$0xff]
        %v723 = vld [vmem:[%s5 + $0xb0] sm:$0xf]
        %v724 = vld [vmem:[%s5 + $0xb4] sm:$0xff]
        %v725 = vld [vmem:[%s5 + $0xbc] sm:$0xf]
        %v726 = vpack.c.bf16 %v693, %v692
        %v727 = vld [vmem:[%s6] sm:$0x7]
        %v729 = vlaneseq
        %v730 = vshrl.u32 %v729, 7
        %v731 = vsub.s32 0, %v730
        %v732 = vrot.slane %v727, %v731
        %v733 = vlaneseq
        %v734 = vshrl.u32 %v733, 7
        %v735 = vsub.s32 1, %v734
        %v736 = vrot.slane %v727, %v735
        %v737 = vlaneseq
        %v738 = vshrl.u32 %v737, 7
        %v739 = vsub.s32 2, %v738
        %v740 = vrot.slane %v727, %v739
        %v776 = vunpack.c.l.b16 %v694
        %v777 = vunpack.c.h.b16 %v694
        %v778 = vunpack.c.l.b16 %v695
        %v779 = vunpack.c.l.b16 %v696
        %v780 = vunpack.c.h.b16 %v696
        %v781 = vunpack.c.l.b16 %v697
        %v782 = vunpack.c.l.b16 %v698
        %v783 = vunpack.c.h.b16 %v698
        %v784 = vunpack.c.l.b16 %v699
        %v785 = vunpack.c.l.b16 %v700
        %v786 = vunpack.c.h.b16 %v700
        %v787 = vunpack.c.l.b16 %v701
        %v788 = vunpack.c.l.b16 %v702
        %v789 = vunpack.c.h.b16 %v702
        %v790 = vunpack.c.l.b16 %v703
        %v791 = vunpack.c.l.b16 %v704
        %v792 = vunpack.c.h.b16 %v704
        %v793 = vunpack.c.l.b16 %v705
        %v794 = vunpack.c.l.b16 %v706
        %v795 = vunpack.c.h.b16 %v706
        %v796 = vunpack.c.l.b16 %v707
        %v797 = vunpack.c.l.b16 %v708
        %v798 = vunpack.c.h.b16 %v708
        %v799 = vunpack.c.l.b16 %v709
        %v800 = vunpack.c.l.b16 %v710
        %v801 = vunpack.c.h.b16 %v710
        %v802 = vunpack.c.l.b16 %v711
        %v803 = vunpack.c.l.b16 %v712
        %v804 = vunpack.c.h.b16 %v712
        %v805 = vunpack.c.l.b16 %v713
        %v806 = vunpack.c.l.b16 %v714
        %v807 = vunpack.c.h.b16 %v714
        %v808 = vunpack.c.l.b16 %v715
        %v809 = vunpack.c.l.b16 %v716
        %v810 = vunpack.c.h.b16 %v716
        %v811 = vunpack.c.l.b16 %v717
        %v812 = vunpack.c.l.b16 %v718
        %v813 = vunpack.c.h.b16 %v718
        %v814 = vunpack.c.l.b16 %v719
        %v815 = vunpack.c.l.b16 %v720
        %v816 = vunpack.c.h.b16 %v720
        %v817 = vunpack.c.l.b16 %v721
        %v818 = vunpack.c.l.b16 %v722
        %v819 = vunpack.c.h.b16 %v722
        %v820 = vunpack.c.l.b16 %v723
        %v821 = vunpack.c.l.b16 %v724
        %v822 = vunpack.c.h.b16 %v724
        %v823 = vunpack.c.l.b16 %v725
        %v824 = vpack.c.b16 %v779, %v776
        %v825 = vpack.c.b16 %v780, %v777
        %v826 = vpack.c.b16 %v781, %v778
        %v827 = vpack.c.b16 %v785, %v782
        %v828 = vpack.c.b16 %v786, %v783
        %v829 = vpack.c.b16 %v787, %v784
        %v830 = vpack.c.b16 %v791, %v788
        %v831 = vpack.c.b16 %v792, %v789
        %v832 = vpack.c.b16 %v793, %v790
        %v833 = vpack.c.b16 %v797, %v794
        %v834 = vpack.c.b16 %v798, %v795
        %v835 = vpack.c.b16 %v799, %v796
        %v836 = vpack.c.b16 %v803, %v800
        %v837 = vpack.c.b16 %v804, %v801
        %v838 = vpack.c.b16 %v805, %v802
        %v839 = vpack.c.b16 %v809, %v806
        %v840 = vpack.c.b16 %v810, %v807
        %v841 = vpack.c.b16 %v811, %v808
        %v842 = vpack.c.b16 %v815, %v812
        %v843 = vpack.c.b16 %v816, %v813
        %v844 = vpack.c.b16 %v817, %v814
        %v845 = vpack.c.b16 %v821, %v818
        %v846 = vpack.c.b16 %v822, %v819
        %v847 = vpack.c.b16 %v823, %v820
        %872 = vmatprep.subr.bf16.mxu0 %v825
        %873 = vmatpush1.bf16.msra.mxu0 %v824
        %874 = vmatprep.subr.bf16.mxu0 %v828
        %875 = vmatpush1.bf16.msra.mxu0 %v827
        %876 = vmatprep.subr.bf16.mxu0 %v831
        %877 = vmatpush1.bf16.msra.mxu0 %v830
        %878 = vmatprep.subr.bf16.mxu0 %v834
        %879 = vmatpush1.bf16.msra.mxu0 %v833
        %880 = vmatprep.subr.bf16.mxu0 %v837
        %881 = vmatpush1.bf16.msra.mxu0 %v836
        %882 = vmatprep.subr.bf16.mxu0 %v840
        %883 = vmatpush1.bf16.msra.mxu0 %v839
        %884 = vmatprep.subr.bf16.mxu0 %v843
        %885 = vmatpush1.bf16.msra.mxu0 %v842
        %886 = vmatprep.subr.bf16.mxu0 %v846
        %887 = vmatpush1.bf16.msra.mxu0 %v845
        %888 = vmatprep.subr.bf16.mxu0 0
        %889 = vmatpush1.bf16.msra.mxu0 0
        %890 = vmatprep.subr.bf16.mxu0 0
        %891 = vmatpush1.bf16.msra.mxu0 0
        %892 = vmatprep.subr.bf16.mxu0 0
        %893 = vmatpush1.bf16.msra.mxu0 0
        %894 = vmatprep.subr.bf16.mxu0 0
        %895 = vmatpush1.bf16.msra.mxu0 0
        %896 = vmatprep.subr.bf16.mxu0 0
        %897 = vmatpush1.bf16.msra.mxu0 0
        %898 = vmatprep.subr.bf16.mxu0 0
        %899 = vmatpush1.bf16.msra.mxu0 0
        %900 = vmatprep.subr.bf16.mxu0 0
        %901 = vmatpush1.bf16.msra.mxu0 0
        %902 = vmatprep.subr.bf16.mxu0 0
        %903 = vmatpush1.bf16.msra.mxu0 0
        %904 = vmatprep.mubr.bf16.mxu0 0
        %905 = vmatmul.mubr.bf16.gmra.mrb[0].mxu0 %v726
        %v906 = vpop.f32.mrb[0].mxu0
        %v907 = vadd.f32 %v732, %v906
        %v908 = vpop.f32.mrb[0].mxu0
        %v909 = vadd.f32 %v736, %v908
        %v910 = vpop.f32.mrb[0].mxu0
        %v911 = vadd.f32 %v732, %v910
        %v912 = vpop.f32.mrb[0].mxu0
        %v913 = vadd.f32 %v736, %v912
        %914 = vdwg.mxu0
        %915 = vmatprep.subr.bf16.mxu0 0
        %916 = vmatpush1.bf16.msra.mxu0 %v826
        %917 = vmatprep.subr.bf16.mxu0 0
        %918 = vmatpush1.bf16.msra.mxu0 %v829
        %919 = vmatprep.subr.bf16.mxu0 0
        %920 = vmatpush1.bf16.msra.mxu0 %v832
        %921 = vmatprep.subr.bf16.mxu0 0
        %922 = vmatpush1.bf16.msra.mxu0 %v835
        %923 = vmatprep.subr.bf16.mxu0 0
        %924 = vmatpush1.bf16.msra.mxu0 %v838
        %925 = vmatprep.subr.bf16.mxu0 0
        %926 = vmatpush1.bf16.msra.mxu0 %v841
        %927 = vmatprep.subr.bf16.mxu0 0
        %928 = vmatpush1.bf16.msra.mxu0 %v844
        %929 = vmatprep.subr.bf16.mxu0 0
        %930 = vmatpush1.bf16.msra.mxu0 %v847
        %931 = vmatprep.subr.bf16.mxu0 0
        %932 = vmatpush1.bf16.msra.mxu0 0
        %933 = vmatprep.subr.bf16.mxu0 0
        %934 = vmatpush1.bf16.msra.mxu0 0
        %935 = vmatprep.subr.bf16.mxu0 0
        %936 = vmatpush1.bf16.msra.mxu0 0
        %937 = vmatprep.subr.bf16.mxu0 0
        %938 = vmatpush1.bf16.msra.mxu0 0
        %939 = vmatprep.subr.bf16.mxu0 0
        %940 = vmatpush1.bf16.msra.mxu0 0
        %941 = vmatprep.subr.bf16.mxu0 0
        %942 = vmatpush1.bf16.msra.mxu0 0
        %943 = vmatprep.subr.bf16.mxu0 0
        %944 = vmatpush1.bf16.msra.mxu0 0
        %945 = vmatprep.subr.bf16.mxu0 0
        %946 = vmatpush1.bf16.msra.mxu0 0
        %947 = vmatprep.mubr.bf16.mxu0 0
        %948 = vmatmul.mubr.bf16.gmra.mrb[0].mxu0 %v726
        %v949 = vpop.f32.mrb[0].mxu0
        %v950 = vadd.f32 %v740, %v949
        %v951 = vpop.f32.mrb[0].mxu0
        %v952 = vpop.f32.mrb[0].mxu0
        %v953 = vadd.f32 %v740, %v952
        %v954 = vpop.f32.mrb[0].mxu0
        %955 = vdwg.mxu0
        %v956 = vld [vmem:[%s645] sm:$0x1]
        %v957 = vsub.f32 %v956, 1.0
        %v958 = vmul.f32 %v957, 1e+09
        %v959 = vpack.c.bf16 %v911, %v907
        %v960 = vpack.c.bf16 %v913, %v909
        %vm961 = vcmask 523264
        %v963 = vsel %vm961, %v959, 0
        %v966 = vsel %vm961, %v960, 0
        %968 = vmatprep.subr.bf16.mxu0 0
        %969 = vmatpush1.bf16.xpose.msra.mxu0 %v966
        %970 = vmatprep.subr.bf16.mxu0 0
        %971 = vmatpush1.bf16.xpose.msra.mxu0 0
        %972 = vmatprep.subr.bf16.mxu0 0
        %973 = vmatpush1.bf16.xpose.msra.mxu0 0
        %974 = vmatprep.subr.bf16.mxu0 0
        %975 = vmatpush1.bf16.xpose.msra.mxu0 0
        %976 = vmatprep.subr.bf16.mxu0 0
        %977 = vmatpush1.bf16.xpose.msra.mxu0 0
        %978 = vmatprep.subr.bf16.mxu0 0
        %979 = vmatpush1.bf16.xpose.msra.mxu0 0
        %980 = vmatprep.subr.bf16.mxu0 0
        %981 = vmatpush1.bf16.xpose.msra.mxu0 0
        %982 = vmatprep.subr.bf16.mxu0 0
        %983 = vmatpush1.bf16.xpose.msra.mxu0 0
        %984 = vmatprep.subr.bf16.mxu0 0
        %985 = vmatpush1.bf16.xpose.msra.mxu0 0
        %986 = vmatprep.subr.bf16.mxu0 0
        %987 = vmatpush1.bf16.xpose.msra.mxu0 0
        %988 = vmatprep.subr.bf16.mxu0 0
        %989 = vmatpush1.bf16.xpose.msra.mxu0 0
        %990 = vmatprep.subr.bf16.mxu0 0
        %991 = vmatpush1.bf16.xpose.msra.mxu0 0
        %992 = vmatprep.subr.bf16.mxu0 0
        %993 = vmatpush1.bf16.xpose.msra.mxu0 0
        %994 = vmatprep.subr.bf16.mxu0 0
        %995 = vmatpush1.bf16.xpose.msra.mxu0 0
        %996 = vmatprep.subr.bf16.mxu0 0
        %997 = vmatpush1.bf16.xpose.msra.mxu0 0
        %998 = vmatprep.subr.bf16.mxu0 0
        %999 = vmatpush1.bf16.xpose.msra.mxu0 0
        %1000 = vmatprep.mubr.bf16.mxu0 0
        %1001 = vmatmul.mubr.bf16.gmra.mrb[0].mxu0 %v963
        %v1002 = vpop.f32.mrb[0].mxu0
        %v1003 = vadd.f32 0.0, %v1002
        %v1004 = vpop.f32.mrb[0].mxu0
        %v1005 = vpop.f32.mrb[0].mxu0
        %v1006 = vadd.f32 0.0, %v1005
        %v1007 = vpop.f32.mrb[0].mxu0
        %1008 = vdwg.mxu0
        %v1009 = vmul.f32 %v1003, 0.125
        %v1010 = vmul.f32 %v1006, 0.125
        %v1012 = vlaneseq
        %v1013 = vshrl.u32 %v1012, 7
        %v1014 = vsub.s32 0, %v1013
        %v1015 = vrot.slane %v958, %v1014
        %v1017 = vadd.f32 %v1009, %v1015
        %v1018 = vadd.f32 %v1010, %v1015
        %vm1019 = vcmask 130048
        %v1020 = vsel %vm1019, %v1017, -inf
        %1021 = vmax.xlane.f32.xlu0 %v1020
        %v1022 = vpop.xlane.xlu0 %1021
        %v1023 = vsel %vm1019, %v1018, -inf
        %1024 = vmax.xlane.f32.xlu0 %v1023
        %v1025 = vpop.xlane.xlu0 %1024
        %v1026 = vsub.f32 %v1017, %v1022
        %v1027 = vsub.f32 %v1018, %v1025
        %v1028 = vmul.f32 %v1026, 1.442695
        %v1029 = vpow.pop %v1028
        %v1030 = vmul.f32 %v1027, 1.442695
        %v1031 = vpow.pop %v1030
        %v1032 = vsel %vm1019, %v1029, 0.0
        %1033 = vadd.xlane.f32.xlu0 %v1032
        %v1034 = vpop.xlane.xlu0 %1033
        %v1035 = vsel %vm1019, %v1031, 0.0
        %1036 = vadd.xlane.f32.xlu0 %v1035
        %v1037 = vpop.xlane.xlu0 %1036
        %v1038 = vrcp.pop %v1034
        %v1039 = vrcp.pop %v1037
        %v1040 = vmul.f32 %v1029, %v1038
        %v1041 = vmul.f32 %v1031, %v1039
        %1042 = vst.msk [vmem:[%s630] sm:$0xff] %vm1019, %v1040
        %1043 = vst.msk [vmem:[%s630 + $0x8] sm:$0xff] %vm1019, %v1041
        %v1044 = vpack.c.bf16 %v1041, %v1040
        %v1045 = vpack.c.bf16 %v953, %v950
        %v1047 = vsel %vm1019, %v1044, 0
        %1049 = vmatprep.subr.bf16.mxu0 0
        %1050 = vmatpush1.bf16.msra.mxu0 %v1045
        %1051 = vmatprep.subr.bf16.mxu0 0
        %1052 = vmatpush1.bf16.msra.mxu0 0
        %1053 = vmatprep.subr.bf16.mxu0 0
        %1054 = vmatpush1.bf16.msra.mxu0 0
        %1055 = vmatprep.subr.bf16.mxu0 0
        %1056 = vmatpush1.bf16.msra.mxu0 0
        %1057 = vmatprep.subr.bf16.mxu0 0
        %1058 = vmatpush1.bf16.msra.mxu0 0
        %1059 = vmatprep.subr.bf16.mxu0 0
        %1060 = vmatpush1.bf16.msra.mxu0 0
        %1061 = vmatprep.subr.bf16.mxu0 0
        %1062 = vmatpush1.bf16.msra.mxu0 0
        %1063 = vmatprep.subr.bf16.mxu0 0
        %1064 = vmatpush1.bf16.msra.mxu0 0
        %1065 = vmatprep.subr.bf16.mxu0 0
        %1066 = vmatpush1.bf16.msra.mxu0 0
        %1067 = vmatprep.subr.bf16.mxu0 0
        %1068 = vmatpush1.bf16.msra.mxu0 0
        %1069 = vmatprep.subr.bf16.mxu0 0
        %1070 = vmatpush1.bf16.msra.mxu0 0
        %1071 = vmatprep.subr.bf16.mxu0 0
        %1072 = vmatpush1.bf16.msra.mxu0 0
        %1073 = vmatprep.subr.bf16.mxu0 0
        %1074 = vmatpush1.bf16.msra.mxu0 0
        %1075 = vmatprep.subr.bf16.mxu0 0
        %1076 = vmatpush1.bf16.msra.mxu0 0
        %1077 = vmatprep.subr.bf16.mxu0 0
        %1078 = vmatpush1.bf16.msra.mxu0 0
        %1079 = vmatprep.subr.bf16.mxu0 0
        %1080 = vmatpush1.bf16.msra.mxu0 0
        %1081 = vmatprep.mubr.bf16.mxu0 0
        %1082 = vmatmul.mubr.bf16.gmra.mrb[0].mxu0 %v1047
        %v1083 = vpop.f32.mrb[0].mxu0
        %v1084 = vadd.f32 0.0, %v1083
        %v1085 = vpop.f32.mrb[0].mxu0
        %v1086 = vpop.f32.mrb[0].mxu0
        %v1087 = vadd.f32 0.0, %v1086
        %v1088 = vpop.f32.mrb[0].mxu0
        %1089 = vdwg.mxu0
        %1090 = vst.msk [vmem:[#allocation2] sm:$0xff] %vm961, %v1084
        %1091 = vst.msk [vmem:[#allocation2 + $0x8] sm:$0xff] %vm961, %v1087
        %1093 = vrot.lane.b32.xlu0 %v959, 64
        %v1094 = vpop.permute.xlu0 %1093
        %1096 = vrot.lane.b32.xlu0 %v960, 64
        %v1097 = vpop.permute.xlu0 %1096
        %v1099 = vsel %vm961, %v1094, 0
        %v1102 = vsel %vm961, %v1097, 0
        %1104 = vmatprep.subr.bf16.mxu0 0
        %1105 = vmatpush1.bf16.xpose.msra.mxu0 %v1102
        %1106 = vmatprep.subr.bf16.mxu0 0
        %1107 = vmatpush1.bf16.xpose.msra.mxu0 0
        %1108 = vmatprep.subr.bf16.mxu0 0
        %1109 = vmatpush1.bf16.xpose.msra.mxu0 0
        %1110 = vmatprep.subr.bf16.mxu0 0
        %1111 = vmatpush1.bf16.xpose.msra.mxu0 0
        %1112 = vmatprep.subr.bf16.mxu0 0
        %1113 = vmatpush1.bf16.xpose.msra.mxu0 0
        %1114 = vmatprep.subr.bf16.mxu0 0
        %1115 = vmatpush1.bf16.xpose.msra.mxu0 0
        %1116 = vmatprep.subr.bf16.mxu0 0
        %1117 = vmatpush1.bf16.xpose.msra.mxu0 0
        %1118 = vmatprep.subr.bf16.mxu0 0
        %1119 = vmatpush1.bf16.xpose.msra.mxu0 0
        %1120 = vmatprep.subr.bf16.mxu0 0
        %1121 = vmatpush1.bf16.xpose.msra.mxu0 0
        %1122 = vmatprep.subr.bf16.mxu0 0
        %1123 = vmatpush1.bf16.xpose.msra.mxu0 0
        %1124 = vmatprep.subr.bf16.mxu0 0
        %1125 = vmatpush1.bf16.xpose.msra.mxu0 0
        %1126 = vmatprep.subr.bf16.mxu0 0
        %1127 = vmatpush1.bf16.xpose.msra.mxu0 0
        %1128 = vmatprep.subr.bf16.mxu0 0
        %1129 = vmatpush1.bf16.xpose.msra.mxu0 0
        %1130 = vmatprep.subr.bf16.mxu0 0
        %1131 = vmatpush1.bf16.xpose.msra.mxu0 0
        %1132 = vmatprep.subr.bf16.mxu0 0
        %1133 = vmatpush1.bf16.xpose.msra.mxu0 0
        %1134 = vmatprep.subr.bf16.mxu0 0
        %1135 = vmatpush1.bf16.xpose.msra.mxu0 0
        %1136 = vmatprep.mubr.bf16.mxu0 0
        %1137 = vmatmul.mubr.bf16.gmra.mrb[0].mxu0 %v1099
        %v1138 = vpop.f32.mrb[0].mxu0
        %v1139 = vadd.f32 0.0, %v1138
        %v1140 = vpop.f32.mrb[0].mxu0
        %v1141 = vpop.f32.mrb[0].mxu0
        %v1142 = vadd.f32 0.0, %v1141
        %v1143 = vpop.f32.mrb[0].mxu0
        %1144 = vdwg.mxu0
        %v1145 = vmul.f32 %v1139, 0.125
        %v1146 = vmul.f32 %v1142, 0.125
        %v1147 = vadd.f32 %v1145, %v1015
        %v1148 = vadd.f32 %v1146, %v1015
        %v1149 = vsel %vm1019, %v1147, -inf
        %1150 = vmax.xlane.f32.xlu0 %v1149
        %v1151 = vpop.xlane.xlu0 %1150
        %v1152 = vsel %vm1019, %v1148, -inf
        %1153 = vmax.xlane.f32.xlu0 %v1152
        %v1154 = vpop.xlane.xlu0 %1153
        %v1155 = vsub.f32 %v1147, %v1151
        %v1156 = vsub.f32 %v1148, %v1154
        %v1157 = vmul.f32 %v1155, 1.442695
        %v1158 = vpow.pop %v1157
        %v1159 = vmul.f32 %v1156, 1.442695
        %v1160 = vpow.pop %v1159
        %v1161 = vsel %vm1019, %v1158, 0.0
        %1162 = vadd.xlane.f32.xlu0 %v1161
        %v1163 = vpop.xlane.xlu0 %1162
        %v1164 = vsel %vm1019, %v1160, 0.0
        %1165 = vadd.xlane.f32.xlu0 %v1164
        %v1166 = vpop.xlane.xlu0 %1165
        %v1167 = vrcp.pop %v1163
        %v1168 = vrcp.pop %v1166
        %v1169 = vmul.f32 %v1158, %v1167
        %v1170 = vmul.f32 %v1160, %v1168
        %s1171 = scalar_lea.vmem %s630, 16 [#allocation5]
        %1172 = vst.msk [vmem:[%s1171] sm:$0xff] %vm1019, %v1169
        %1173 = vst.msk [vmem:[%s1171 + $0x8] sm:$0xff] %vm1019, %v1170
        %v1174 = vpack.c.bf16 %v1170, %v1169
        %1176 = vrot.lane.b32.xlu0 %v1045, 64
        %v1177 = vpop.permute.xlu0 %1176
        %v1180 = vsel %vm1019, %v1174, 0
        %1182 = vmatprep.subr.bf16.mxu0 0
        %1183 = vmatpush1.bf16.msra.mxu0 %v1177
        %1184 = vmatprep.subr.bf16.mxu0 0
        %1185 = vmatpush1.bf16.msra.mxu0 0
        %1186 = vmatprep.subr.bf16.mxu0 0
        %1187 = vmatpush1.bf16.msra.mxu0 0
        %1188 = vmatprep.subr.bf16.mxu0 0
        %1189 = vmatpush1.bf16.msra.mxu0 0
        %1190 = vmatprep.subr.bf16.mxu0 0
        %1191 = vmatpush1.bf16.msra.mxu0 0
        %1192 = vmatprep.subr.bf16.mxu0 0
        %1193 = vmatpush1.bf16.msra.mxu0 0
        %1194 = vmatprep.subr.bf16.mxu0 0
        %1195 = vmatpush1.bf16.msra.mxu0 0
        %1196 = vmatprep.subr.bf16.mxu0 0
        %1197 = vmatpush1.bf16.msra.mxu0 0
        %1198 = vmatprep.subr.bf16.mxu0 0
        %1199 = vmatpush1.bf16.msra.mxu0 0
        %1200 = vmatprep.subr.bf16.mxu0 0
        %1201 = vmatpush1.bf16.msra.mxu0 0
        %1202 = vmatprep.subr.bf16.mxu0 0
        %1203 = vmatpush1.bf16.msra.mxu0 0
        %1204 = vmatprep.subr.bf16.mxu0 0
        %1205 = vmatpush1.bf16.msra.mxu0 0
        %1206 = vmatprep.subr.bf16.mxu0 0
        %1207 = vmatpush1.bf16.msra.mxu0 0
        %1208 = vmatprep.subr.bf16.mxu0 0
        %1209 = vmatpush1.bf16.msra.mxu0 0
        %1210 = vmatprep.subr.bf16.mxu0 0
        %1211 = vmatpush1.bf16.msra.mxu0 0
        %1212 = vmatprep.subr.bf16.mxu0 0
        %1213 = vmatpush1.bf16.msra.mxu0 0
        %1214 = vmatprep.mubr.bf16.mxu0 0
        %1215 = vmatmul.mubr.bf16.gmra.mrb[0].mxu0 %v1180
        %v1216 = vpop.f32.mrb[0].mxu0
        %v1217 = vadd.f32 0.0, %v1216
        %v1218 = vpop.f32.mrb[0].mxu0
        %v1219 = vpop.f32.mrb[0].mxu0
        %v1220 = vadd.f32 0.0, %v1219
        %v1221 = vpop.f32.mrb[0].mxu0
        %1222 = vdwg.mxu0
        %1225 = vrot.lane.b32.xlu0 %v1217, 64
        %v1226 = vpop.permute.xlu0 %1225
        %1227 = vrot.lane.b32.xlu0 %v1220, 64
        %v1228 = vpop.permute.xlu0 %1227
        %vm1231 = vcmask 1048064
        %1232 = vst.msk [vmem:[#allocation2] sm:$0xff] %vm1231, %v1226
        %1233 = vst.msk [vmem:[#allocation2 + $0x8] sm:$0xff] %vm1231, %v1228
        %v1234 = vld [vmem:[#allocation2] sm:$0xff]
        %v1235 = vld [vmem:[#allocation2 + $0x8] sm:$0xff]
        %v1236 = vld [vmem:[%s7] sm:$0xf]
        %v1237 = vld [vmem:[%s7 + $0x4] sm:$0xf]
        %v1238 = vld [vmem:[%s7 + $0x8] sm:$0xf]
        %v1239 = vld [vmem:[%s7 + $0xc] sm:$0xf]
        %v1240 = vld [vmem:[%s7 + $0x10] sm:$0xf]
        %v1241 = vld [vmem:[%s7 + $0x14] sm:$0xf]
        %v1242 = vld [vmem:[%s7 + $0x18] sm:$0xf]
        %v1243 = vld [vmem:[%s7 + $0x1c] sm:$0xf]
        %v1244 = vld [vmem:[%s7 + $0x20] sm:$0xf]
        %v1245 = vld [vmem:[%s7 + $0x24] sm:$0xf]
        %v1246 = vld [vmem:[%s7 + $0x28] sm:$0xf]
        %v1247 = vld [vmem:[%s7 + $0x2c] sm:$0xf]
        %v1248 = vld [vmem:[%s7 + $0x30] sm:$0xf]
        %v1249 = vld [vmem:[%s7 + $0x34] sm:$0xf]
        %v1250 = vld [vmem:[%s7 + $0x38] sm:$0xf]
        %v1251 = vld [vmem:[%s7 + $0x3c] sm:$0xf]
        %v1252 = vpack.c.bf16 %v1235, %v1234
        %v1253 = vld [vmem:[%s8] sm:$0x1]
        %v1255 = vlaneseq
        %v1256 = vshrl.u32 %v1255, 7
        %v1257 = vsub.s32 0, %v1256
        %v1258 = vrot.slane %v1253, %v1257
        %v1276 = vunpack.c.l.b16 %v1236
        %v1277 = vunpack.c.l.b16 %v1237
        %v1278 = vunpack.c.l.b16 %v1238
        %v1279 = vunpack.c.l.b16 %v1239
        %v1280 = vunpack.c.l.b16 %v1240
        %v1281 = vunpack.c.l.b16 %v1241
        %v1282 = vunpack.c.l.b16 %v1242
        %v1283 = vunpack.c.l.b16 %v1243
        %v1284 = vunpack.c.l.b16 %v1244
        %v1285 = vunpack.c.l.b16 %v1245
        %v1286 = vunpack.c.l.b16 %v1246
        %v1287 = vunpack.c.l.b16 %v1247
        %v1288 = vunpack.c.l.b16 %v1248
        %v1289 = vunpack.c.l.b16 %v1249
        %v1290 = vunpack.c.l.b16 %v1250
        %v1291 = vunpack.c.l.b16 %v1251
        %v1292 = vpack.c.b16 %v1277, %v1276
        %v1293 = vpack.c.b16 %v1279, %v1278
        %v1294 = vpack.c.b16 %v1281, %v1280
        %v1295 = vpack.c.b16 %v1283, %v1282
        %v1296 = vpack.c.b16 %v1285, %v1284
        %v1297 = vpack.c.b16 %v1287, %v1286
        %v1298 = vpack.c.b16 %v1289, %v1288
        %v1299 = vpack.c.b16 %v1291, %v1290
        %1308 = vmatprep.subr.bf16.mxu0 0
        %1309 = vmatpush1.bf16.msra.mxu0 %v1292
        %1310 = vmatprep.subr.bf16.mxu0 0
        %1311 = vmatpush1.bf16.msra.mxu0 %v1293
        %1312 = vmatprep.subr.bf16.mxu0 0
        %1313 = vmatpush1.bf16.msra.mxu0 %v1294
        %1314 = vmatprep.subr.bf16.mxu0 0
        %1315 = vmatpush1.bf16.msra.mxu0 %v1295
        %1316 = vmatprep.subr.bf16.mxu0 0
        %1317 = vmatpush1.bf16.msra.mxu0 %v1296
        %1318 = vmatprep.subr.bf16.mxu0 0
        %1319 = vmatpush1.bf16.msra.mxu0 %v1297
        %1320 = vmatprep.subr.bf16.mxu0 0
        %1321 = vmatpush1.bf16.msra.mxu0 %v1298
        %1322 = vmatprep.subr.bf16.mxu0 0
        %1323 = vmatpush1.bf16.msra.mxu0 %v1299
        %1324 = vmatprep.subr.bf16.mxu0 0
        %1325 = vmatpush1.bf16.msra.mxu0 0
        %1326 = vmatprep.subr.bf16.mxu0 0
        %1327 = vmatpush1.bf16.msra.mxu0 0
        %1328 = vmatprep.subr.bf16.mxu0 0
        %1329 = vmatpush1.bf16.msra.mxu0 0
        %1330 = vmatprep.subr.bf16.mxu0 0
        %1331 = vmatpush1.bf16.msra.mxu0 0
        %1332 = vmatprep.subr.bf16.mxu0 0
        %1333 = vmatpush1.bf16.msra.mxu0 0
        %1334 = vmatprep.subr.bf16.mxu0 0
        %1335 = vmatpush1.bf16.msra.mxu0 0
        %1336 = vmatprep.subr.bf16.mxu0 0
        %1337 = vmatpush1.bf16.msra.mxu0 0
        %1338 = vmatprep.subr.bf16.mxu0 0
        %1339 = vmatpush1.bf16.msra.mxu0 0
        %1340 = vmatprep.mubr.bf16.mxu0 0
        %1341 = vmatmul.mubr.bf16.gmra.mrb[0].mxu0 %v1252
        %v1342 = vpop.f32.mrb[0].mxu0
        %v1343 = vadd.f32 %v1258, %v1342
        %v1344 = vpop.f32.mrb[0].mxu0
        %v1345 = vpop.f32.mrb[0].mxu0
        %v1346 = vadd.f32 %v1258, %v1345
        %v1347 = vpop.f32.mrb[0].mxu0
        %1348 = vdwg.mxu0
        %v1349 = vadd.f32 %v692, %v1343
        %v1350 = vadd.f32 %v693, %v1346
        %v1351 = vld [vmem:[%s9] sm:$0x1]
        %v1352 = vld [vmem:[%s10] sm:$0x1]
        %1353 = vadd.xlane.f32.xlu0 %v1349
        %v1354 = vpop.xlane.xlu0 %1353
        %1355 = vadd.xlane.f32.xlu0 %v1350
        %v1356 = vpop.xlane.xlu0 %1355
        %v1357 = vmul.f32 %v1354, %v659
        %v1358 = vmul.f32 %v1356, %v659
        %v1359 = vsub.f32 %v1349, %v1357
        %v1360 = vsub.f32 %v1350, %v1358
        %v1361 = vmul.f32 %v1359, %v1359
        %v1362 = vmul.f32 %v1360, %v1360
        %1363 = vadd.xlane.f32.xlu0 %v1361
        %v1364 = vpop.xlane.xlu0 %1363
        %1365 = vadd.xlane.f32.xlu0 %v1362
        %v1366 = vpop.xlane.xlu0 %1365
        %v1367 = vmul.f32 %v1364, %v659
        %v1368 = vmul.f32 %v1366, %v659
        %v1369 = vadd.f32 %v1367, 1e-12
        %v1370 = vadd.f32 %v1368, 1e-12
        %v1371 = vrsqrt.pop %v1369
        %v1372 = vrsqrt.pop %v1370
        %v1373 = vmul.f32 %v1359, %v1371
        %v1374 = vmul.f32 %v1360, %v1372
        %v1376 = vlaneseq
        %v1377 = vshrl.u32 %v1376, 7
        %v1378 = vsub.s32 0, %v1377
        %v1379 = vrot.slane %v1351, %v1378
        %v1381 = vmul.f32 %v1373, %v1379
        %v1382 = vmul.f32 %v1374, %v1379
        %v1384 = vlaneseq
        %v1385 = vshrl.u32 %v1384, 7
        %v1386 = vsub.s32 0, %v1385
        %v1387 = vrot.slane %v1352, %v1386
        %v1389 = vadd.f32 %v1381, %v1387
        %v1390 = vadd.f32 %v1382, %v1387
        %v1391 = vld [vmem:[%s11] sm:$0xff]
        %v1392 = vld [vmem:[%s11 + $0x8] sm:$0xff]
        %v1393 = vld [vmem:[%s11 + $0x10] sm:$0xff]
        %v1394 = vld [vmem:[%s11 + $0x18] sm:$0xff]
        %v1395 = vld [vmem:[%s11 + $0x20] sm:$0xff]
        %v1396 = vld [vmem:[%s11 + $0x28] sm:$0xff]
        %v1397 = vld [vmem:[%s11 + $0x30] sm:$0xff]
        %v1398 = vld [vmem:[%s11 + $0x38] sm:$0xff]
        %v1399 = vld [vmem:[%s11 + $0x40] sm:$0xff]
        %v1400 = vld [vmem:[%s11 + $0x48] sm:$0xff]
        %v1401 = vld [vmem:[%s11 + $0x50] sm:$0xff]
        %v1402 = vld [vmem:[%s11 + $0x58] sm:$0xff]
        %v1403 = vld [vmem:[%s11 + $0x60] sm:$0xff]
        %v1404 = vld [vmem:[%s11 + $0x68] sm:$0xff]
        %v1405 = vld [vmem:[%s11 + $0x70] sm:$0xff]
        %v1406 = vld [vmem:[%s11 + $0x78] sm:$0xff]
        %v1407 = vpack.c.bf16 %v1390, %v1389
        %v1408 = vld [vmem:[%s12] sm:$0x3]
        %v1410 = vlaneseq
        %v1411 = vshrl.u32 %v1410, 7
        %v1412 = vsub.s32 0, %v1411
        %v1413 = vrot.slane %v1408, %v1412
        %v1414 = vlaneseq
        %v1415 = vshrl.u32 %v1414, 7
        %v1416 = vsub.s32 1, %v1415
        %v1417 = vrot.slane %v1408, %v1416
        %v1436 = vunpack.c.l.b16 %v1391
        %v1437 = vunpack.c.h.b16 %v1391
        %v1438 = vunpack.c.l.b16 %v1392
        %v1439 = vunpack.c.h.b16 %v1392
        %v1440 = vunpack.c.l.b16 %v1393
        %v1441 = vunpack.c.h.b16 %v1393
        %v1442 = vunpack.c.l.b16 %v1394
        %v1443 = vunpack.c.h.b16 %v1394
        %v1444 = vunpack.c.l.b16 %v1395
        %v1445 = vunpack.c.h.b16 %v1395
        %v1446 = vunpack.c.l.b16 %v1396
        %v1447 = vunpack.c.h.b16 %v1396
        %v1448 = vunpack.c.l.b16 %v1397
        %v1449 = vunpack.c.h.b16 %v1397
        %v1450 = vunpack.c.l.b16 %v1398
        %v1451 = vunpack.c.h.b16 %v1398
        %v1452 = vunpack.c.l.b16 %v1399
        %v1453 = vunpack.c.h.b16 %v1399
        %v1454 = vunpack.c.l.b16 %v1400
        %v1455 = vunpack.c.h.b16 %v1400
        %v1456 = vunpack.c.l.b16 %v1401
        %v1457 = vunpack.c.h.b16 %v1401
        %v1458 = vunpack.c.l.b16 %v1402
        %v1459 = vunpack.c.h.b16 %v1402
        %v1460 = vunpack.c.l.b16 %v1403
        %v1461 = vunpack.c.h.b16 %v1403
        %v1462 = vunpack.c.l.b16 %v1404
        %v1463 = vunpack.c.h.b16 %v1404
        %v1464 = vunpack.c.l.b16 %v1405
        %v1465 = vunpack.c.h.b16 %v1405
        %v1466 = vunpack.c.l.b16 %v1406
        %v1467 = vunpack.c.h.b16 %v1406
        %v1468 = vpack.c.b16 %v1438, %v1436
        %v1469 = vpack.c.b16 %v1439, %v1437
        %v1470 = vpack.c.b16 %v1442, %v1440
        %v1471 = vpack.c.b16 %v1443, %v1441
        %v1472 = vpack.c.b16 %v1446, %v1444
        %v1473 = vpack.c.b16 %v1447, %v1445
        %v1474 = vpack.c.b16 %v1450, %v1448
        %v1475 = vpack.c.b16 %v1451, %v1449
        %v1476 = vpack.c.b16 %v1454, %v1452
        %v1477 = vpack.c.b16 %v1455, %v1453
        %v1478 = vpack.c.b16 %v1458, %v1456
        %v1479 = vpack.c.b16 %v1459, %v1457
        %v1480 = vpack.c.b16 %v1462, %v1460
        %v1481 = vpack.c.b16 %v1463, %v1461
        %v1482 = vpack.c.b16 %v1466, %v1464
        %v1483 = vpack.c.b16 %v1467, %v1465
        %1500 = vmatprep.subr.bf16.mxu0 %v1469
        %1501 = vmatpush1.bf16.msra.mxu0 %v1468
        %1502 = vmatprep.subr.bf16.mxu0 %v1471
        %1503 = vmatpush1.bf16.msra.mxu0 %v1470
        %1504 = vmatprep.subr.bf16.mxu0 %v1473
        %1505 = vmatpush1.bf16.msra.mxu0 %v1472
        %1506 = vmatprep.subr.bf16.mxu0 %v1475
        %1507 = vmatpush1.bf16.msra.mxu0 %v1474
        %1508 = vmatprep.subr.bf16.mxu0 %v1477
        %1509 = vmatpush1.bf16.msra.mxu0 %v1476
        %1510 = vmatprep.subr.bf16.mxu0 %v1479
        %1511 = vmatpush1.bf16.msra.mxu0 %v1478
        %1512 = vmatprep.subr.bf16.mxu0 %v1481
        %1513 = vmatpush1.bf16.msra.mxu0 %v1480
        %1514 = vmatprep.subr.bf16.mxu0 %v1483
        %1515 = vmatpush1.bf16.msra.mxu0 %v1482
        %1516 = vmatprep.subr.bf16.mxu0 0
        %1517 = vmatpush1.bf16.msra.mxu0 0
        %1518 = vmatprep.subr.bf16.mxu0 0
        %1519 = vmatpush1.bf16.msra.mxu0 0
        %1520 = vmatprep.subr.bf16.mxu0 0
        %1521 = vmatpush1.bf16.msra.mxu0 0
        %1522 = vmatprep.subr.bf16.mxu0 0
        %1523 = vmatpush1.bf16.msra.mxu0 0
        %1524 = vmatprep.subr.bf16.mxu0 0
        %1525 = vmatpush1.bf16.msra.mxu0 0
        %1526 = vmatprep.subr.bf16.mxu0 0
        %1527 = vmatpush1.bf16.msra.mxu0 0
        %1528 = vmatprep.subr.bf16.mxu0 0
        %1529 = vmatpush1.bf16.msra.mxu0 0
        %1530 = vmatprep.subr.bf16.mxu0 0
        %1531 = vmatpush1.bf16.msra.mxu0 0
        %1532 = vmatprep.mubr.bf16.mxu0 0
        %1533 = vmatmul.mubr.bf16.gmra.mrb[0].mxu0 %v1407
        %v1534 = vpop.f32.mrb[0].mxu0
        %v1535 = vadd.f32 %v1413, %v1534
        %v1536 = vpop.f32.mrb[0].mxu0
        %v1537 = vadd.f32 %v1417, %v1536
        %v1538 = vpop.f32.mrb[0].mxu0
        %v1539 = vadd.f32 %v1413, %v1538
        %v1540 = vpop.f32.mrb[0].mxu0
        %v1541 = vadd.f32 %v1417, %v1540
        %1542 = vdwg.mxu0
        %v1543 = vmul.f32 %v1535, %v1535
        %v1544 = vmul.f32 %v1537, %v1537
        %v1545 = vmul.f32 %v1539, %v1539
        %v1546 = vmul.f32 %v1541, %v1541
        %v1547 = vmul.f32 %v1535, %v1543
        %v1548 = vmul.f32 %v1537, %v1544
        %v1549 = vmul.f32 %v1539, %v1545
        %v1550 = vmul.f32 %v1541, %v1546
        %v1551 = vmul.f32 %v1547, 0.044715
        %v1552 = vmul.f32 %v1548, 0.044715
        %v1553 = vmul.f32 %v1549, 0.044715
        %v1554 = vmul.f32 %v1550, 0.044715
        %v1555 = vadd.f32 %v1535, %v1551
        %v1556 = vadd.f32 %v1537, %v1552
        %v1557 = vadd.f32 %v1539, %v1553
        %v1558 = vadd.f32 %v1541, %v1554
        %v1559 = vmul.f32 %v1555, 0.7978846
        %v1560 = vmul.f32 %v1556, 0.7978846
        %v1561 = vmul.f32 %v1557, 0.7978846
        %v1562 = vmul.f32 %v1558, 0.7978846
        %v1563 = vtanh.pop %v1559
        %v1564 = vtanh.pop %v1560
        %v1565 = vtanh.pop %v1561
        %v1566 = vtanh.pop %v1562
        %v1567 = vadd.f32 %v1563, 1.0
        %v1568 = vadd.f32 %v1564, 1.0
        %v1569 = vadd.f32 %v1565, 1.0
        %v1570 = vadd.f32 %v1566, 1.0
        %v1571 = vmul.f32 %v1567, 0.5
        %v1572 = vmul.f32 %v1568, 0.5
        %v1573 = vmul.f32 %v1569, 0.5
        %v1574 = vmul.f32 %v1570, 0.5
        %v1575 = vmul.f32 %v1535, %v1571
        %v1576 = vmul.f32 %v1537, %v1572
        %v1577 = vmul.f32 %v1539, %v1573
        %v1578 = vmul.f32 %v1541, %v1574
        %v1579 = vld [vmem:[%s13] sm:$0xf]
        %v1580 = vld [vmem:[%s13 + $0x4] sm:$0xf]
        %v1581 = vld [vmem:[%s13 + $0x8] sm:$0xf]
        %v1582 = vld [vmem:[%s13 + $0xc] sm:$0xf]
        %v1583 = vld [vmem:[%s13 + $0x10] sm:$0xf]
        %v1584 = vld [vmem:[%s13 + $0x14] sm:$0xf]
        %v1585 = vld [vmem:[%s13 + $0x18] sm:$0xf]
        %v1586 = vld [vmem:[%s13 + $0x1c] sm:$0xf]
        %v1587 = vld [vmem:[%s13 + $0x20] sm:$0xf]
        %v1588 = vld [vmem:[%s13 + $0x24] sm:$0xf]
        %v1589 = vld [vmem:[%s13 + $0x28] sm:$0xf]
        %v1590 = vld [vmem:[%s13 + $0x2c] sm:$0xf]
        %v1591 = vld [vmem:[%s13 + $0x30] sm:$0xf]
        %v1592 = vld [vmem:[%s13 + $0x34] sm:$0xf]
        %v1593 = vld [vmem:[%s13 + $0x38] sm:$0xf]
        %v1594 = vld [vmem:[%s13 + $0x3c] sm:$0xf]
        %v1595 = vld [vmem:[%s13 + $0x40] sm:$0xf]
        %v1596 = vld [vmem:[%s13 + $0x44] sm:$0xf]
        %v1597 = vld [vmem:[%s13 + $0x48] sm:$0xf]
        %v1598 = vld [vmem:[%s13 + $0x4c] sm:$0xf]
        %v1599 = vld [vmem:[%s13 + $0x50] sm:$0xf]
        %v1600 = vld [vmem:[%s13 + $0x54] sm:$0xf]
        %v1601 = vld [vmem:[%s13 + $0x58] sm:$0xf]
        %v1602 = vld [vmem:[%s13 + $0x5c] sm:$0xf]
        %v1603 = vld [vmem:[%s13 + $0x60] sm:$0xf]
        %v1604 = vld [vmem:[%s13 + $0x64] sm:$0xf]
        %v1605 = vld [vmem:[%s13 + $0x68] sm:$0xf]
        %v1606 = vld [vmem:[%s13 + $0x6c] sm:$0xf]
        %v1607 = vld [vmem:[%s13 + $0x70] sm:$0xf]
        %v1608 = vld [vmem:[%s13 + $0x74] sm:$0xf]
        %v1609 = vld [vmem:[%s13 + $0x78] sm:$0xf]
        %v1610 = vld [vmem:[%s13 + $0x7c] sm:$0xf]
        %v1611 = vpack.c.bf16 %v1577, %v1575
        %v1612 = vpack.c.bf16 %v1578, %v1576
        %v1613 = vld [vmem:[%s14] sm:$0x1]
        %v1615 = vlaneseq
        %v1616 = vshrl.u32 %v1615, 7
        %v1617 = vsub.s32 0, %v1616
        %v1618 = vrot.slane %v1613, %v1617
        %v1652 = vunpack.c.l.b16 %v1579
        %v1653 = vunpack.c.l.b16 %v1580
        %v1654 = vunpack.c.l.b16 %v1581
        %v1655 = vunpack.c.l.b16 %v1582
        %v1656 = vunpack.c.l.b16 %v1583
        %v1657 = vunpack.c.l.b16 %v1584
        %v1658 = vunpack.c.l.b16 %v1585
        %v1659 = vunpack.c.l.b16 %v1586
        %v1660 = vunpack.c.l.b16 %v1587
        %v1661 = vunpack.c.l.b16 %v1588
        %v1662 = vunpack.c.l.b16 %v1589
        %v1663 = vunpack.c.l.b16 %v1590
        %v1664 = vunpack.c.l.b16 %v1591
        %v1665 = vunpack.c.l.b16 %v1592
        %v1666 = vunpack.c.l.b16 %v1593
        %v1667 = vunpack.c.l.b16 %v1594
        %v1668 = vunpack.c.l.b16 %v1595
        %v1669 = vunpack.c.l.b16 %v1596
        %v1670 = vunpack.c.l.b16 %v1597
        %v1671 = vunpack.c.l.b16 %v1598
        %v1672 = vunpack.c.l.b16 %v1599
        %v1673 = vunpack.c.l.b16 %v1600
        %v1674 = vunpack.c.l.b16 %v1601
        %v1675 = vunpack.c.l.b16 %v1602
        %v1676 = vunpack.c.l.b16 %v1603
        %v1677 = vunpack.c.l.b16 %v1604
        %v1678 = vunpack.c.l.b16 %v1605
        %v1679 = vunpack.c.l.b16 %v1606
        %v1680 = vunpack.c.l.b16 %v1607
        %v1681 = vunpack.c.l.b16 %v1608
        %v1682 = vunpack.c.l.b16 %v1609
        %v1683 = vunpack.c.l.b16 %v1610
        %v1684 = vpack.c.b16 %v1653, %v1652
        %v1685 = vpack.c.b16 %v1655, %v1654
        %v1686 = vpack.c.b16 %v1657, %v1656
        %v1687 = vpack.c.b16 %v1659, %v1658
        %v1688 = vpack.c.b16 %v1661, %v1660
        %v1689 = vpack.c.b16 %v1663, %v1662
        %v1690 = vpack.c.b16 %v1665, %v1664
        %v1691 = vpack.c.b16 %v1667, %v1666
        %v1692 = vpack.c.b16 %v1669, %v1668
        %v1693 = vpack.c.b16 %v1671, %v1670
        %v1694 = vpack.c.b16 %v1673, %v1672
        %v1695 = vpack.c.b16 %v1675, %v1674
        %v1696 = vpack.c.b16 %v1677, %v1676
        %v1697 = vpack.c.b16 %v1679, %v1678
        %v1698 = vpack.c.b16 %v1681, %v1680
        %v1699 = vpack.c.b16 %v1683, %v1682
        %1716 = vmatprep.subr.bf16.mxu0 0
        %1717 = vmatpush1.bf16.msra.mxu0 %v1684
        %1718 = vmatprep.subr.bf16.mxu0 0
        %1719 = vmatpush1.bf16.msra.mxu0 %v1685
        %1720 = vmatprep.subr.bf16.mxu0 0
        %1721 = vmatpush1.bf16.msra.mxu0 %v1686
        %1722 = vmatprep.subr.bf16.mxu0 0
        %1723 = vmatpush1.bf16.msra.mxu0 %v1687
        %1724 = vmatprep.subr.bf16.mxu0 0
        %1725 = vmatpush1.bf16.msra.mxu0 %v1688
        %1726 = vmatprep.subr.bf16.mxu0 0
        %1727 = vmatpush1.bf16.msra.mxu0 %v1689
        %1728 = vmatprep.subr.bf16.mxu0 0
        %1729 = vmatpush1.bf16.msra.mxu0 %v1690
        %1730 = vmatprep.subr.bf16.mxu0 0
        %1731 = vmatpush1.bf16.msra.mxu0 %v1691
        %1732 = vmatprep.subr.bf16.mxu0 0
        %1733 = vmatpush1.bf16.msra.mxu0 %v1692
        %1734 = vmatprep.subr.bf16.mxu0 0
        %1735 = vmatpush1.bf16.msra.mxu0 %v1693
        %1736 = vmatprep.subr.bf16.mxu0 0
        %1737 = vmatpush1.bf16.msra.mxu0 %v1694
        %1738 = vmatprep.subr.bf16.mxu0 0
        %1739 = vmatpush1.bf16.msra.mxu0 %v1695
        %1740 = vmatprep.subr.bf16.mxu0 0
        %1741 = vmatpush1.bf16.msra.mxu0 %v1696
        %1742 = vmatprep.subr.bf16.mxu0 0
        %1743 = vmatpush1.bf16.msra.mxu0 %v1697
        %1744 = vmatprep.subr.bf16.mxu0 0
        %1745 = vmatpush1.bf16.msra.mxu0 %v1698
        %1746 = vmatprep.subr.bf16.mxu0 0
        %1747 = vmatpush1.bf16.msra.mxu0 %v1699
        %1748 = vmatprep.mubr.bf16.mxu0 %v1612
        %1749 = vmatmul.mubr.bf16.gmra.mrb[0].mxu0 %v1611
        %v1750 = vpop.f32.mrb[0].mxu0
        %v1751 = vadd.f32 %v1618, %v1750
        %v1752 = vpop.f32.mrb[0].mxu0
        %v1753 = vpop.f32.mrb[0].mxu0
        %v1754 = vadd.f32 %v1618, %v1753
        %v1755 = vpop.f32.mrb[0].mxu0
        %1756 = vdwg.mxu0
        %v1757 = vadd.f32 %v1389, %v1751
        %v1758 = vadd.f32 %v1390, %v1754
        %v1759 = vld [vmem:[%s15] sm:$0x1]
        %v1760 = vld [vmem:[%s16] sm:$0x1]
        %1761 = vadd.xlane.f32.xlu0 %v1757
        %v1762 = vpop.xlane.xlu0 %1761
        %1763 = vadd.xlane.f32.xlu0 %v1758
        %v1764 = vpop.xlane.xlu0 %1763
        %v1765 = vmul.f32 %v1762, %v659
        %v1766 = vmul.f32 %v1764, %v659
        %v1767 = vsub.f32 %v1757, %v1765
        %v1768 = vsub.f32 %v1758, %v1766
        %v1769 = vmul.f32 %v1767, %v1767
        %v1770 = vmul.f32 %v1768, %v1768
        %1771 = vadd.xlane.f32.xlu0 %v1769
        %v1772 = vpop.xlane.xlu0 %1771
        %1773 = vadd.xlane.f32.xlu0 %v1770
        %v1774 = vpop.xlane.xlu0 %1773
        %v1775 = vmul.f32 %v1772, %v659
        %v1776 = vmul.f32 %v1774, %v659
        %v1777 = vadd.f32 %v1775, 1e-12
        %v1778 = vadd.f32 %v1776, 1e-12
        %v1779 = vrsqrt.pop %v1777
        %v1780 = vrsqrt.pop %v1778
        %v1781 = vmul.f32 %v1767, %v1779
        %v1782 = vmul.f32 %v1768, %v1780
        %v1784 = vlaneseq
        %v1785 = vshrl.u32 %v1784, 7
        %v1786 = vsub.s32 0, %v1785
        %v1787 = vrot.slane %v1759, %v1786
        %v1789 = vmul.f32 %v1781, %v1787
        %v1790 = vmul.f32 %v1782, %v1787
        %v1792 = vlaneseq
        %v1793 = vshrl.u32 %v1792, 7
        %v1794 = vsub.s32 0, %v1793
        %v1795 = vrot.slane %v1760, %v1794
        %v1797 = vadd.f32 %v1789, %v1795
        %v1798 = vadd.f32 %v1790, %v1795
        %1799 = vst [vmem:[%s623] sm:$0xff] %v1797
        %1800 = vst [vmem:[%s623 + $0x8] sm:$0xff] %v1798
        %v1801 = vld [vmem:[%s649] sm:$0xf]
        %v1802 = vsub.f32 %v1801, 1.0
        %v1803 = vmul.f32 %v1802, 1e+09
        %v1804 = vlaneseq
        %v1805 = vshrl.u32 %v1804, 7
        %v1806 = vsub.s32 0, %v1805
        %v1807 = vrot.slane %v1803, %v1806
        %1809 = vbcast.lane.b32.xlu0 %v1807, 256
        %v1810 = vpop.permute.xlu0 %1809
        %s1812 = sor.u32 256, 8
        %1813 = vbcast.lane.b32.xlu0 %v1807, %s1812
        %v1814 = vpop.permute.xlu0 %1813
        %v1815 = vlaneseq
        %v1816 = vshrl.u32 %v1815, 7
        %v1817 = vsub.s32 1, %v1816
        %v1818 = vrot.slane %v1803, %v1817
        %1820 = vbcast.lane.b32.xlu0 %v1818, 256
        %v1821 = vpop.permute.xlu0 %1820
        %s1823 = sor.u32 256, 8
        %1824 = vbcast.lane.b32.xlu0 %v1818, %s1823
        %v1825 = vpop.permute.xlu0 %1824
        %v1826 = vlaneseq
        %v1827 = vshrl.u32 %v1826, 7
        %v1828 = vsub.s32 2, %v1827
        %v1829 = vrot.slane %v1803, %v1828
        %1831 = vbcast.lane.b32.xlu0 %v1829, 256
        %v1832 = vpop.permute.xlu0 %1831
        %s1834 = sor.u32 256, 8
        %1835 = vbcast.lane.b32.xlu0 %v1829, %s1834
        %v1836 = vpop.permute.xlu0 %1835
        %v1837 = vlaneseq
        %v1838 = vshrl.u32 %v1837, 7
        %v1839 = vsub.s32 3, %v1838
        %v1840 = vrot.slane %v1803, %v1839
        %1842 = vbcast.lane.b32.xlu0 %v1840, 256
        %v1843 = vpop.permute.xlu0 %1842
        %s1845 = sor.u32 256, 8
        %1846 = vbcast.lane.b32.xlu0 %v1840, %s1845
        %v1847 = vpop.permute.xlu0 %1846
        %v1848 = vadd.f32 %v1797, %v1810
        %v1849 = vadd.f32 %v1798, %v1814
        %v1850 = vadd.f32 %v1797, %v1821
        %v1851 = vadd.f32 %v1798, %v1825
        %v1852 = vadd.f32 %v1797, %v1832
        %v1853 = vadd.f32 %v1798, %v1836
        %v1854 = vadd.f32 %v1797, %v1843
        %v1855 = vadd.f32 %v1798, %v1847
        %v1856 = vmax.f32 %v1848, %v1849
        %v1857 = vrot.slane %v1856, 4
        %v1858 = vmax.f32 %v1856, %v1857
        %v1859 = vrot.slane %v1858, 2
        %v1860 = vmax.f32 %v1858, %v1859
        %v1861 = vrot.slane %v1860, 1
        %v1862 = vmax.f32 %v1860, %v1861
        %v1863 = vmax.f32 %v1850, %v1851
        %v1864 = vrot.slane %v1863, 4
        %v1865 = vmax.f32 %v1863, %v1864
        %v1866 = vrot.slane %v1865, 2
        %v1867 = vmax.f32 %v1865, %v1866
        %v1868 = vrot.slane %v1867, 1
        %v1869 = vmax.f32 %v1867, %v1868
        %v1870 = vmax.f32 %v1852, %v1853
        %v1871 = vrot.slane %v1870, 4
        %v1872 = vmax.f32 %v1870, %v1871
        %v1873 = vrot.slane %v1872, 2
        %v1874 = vmax.f32 %v1872, %v1873
        %v1875 = vrot.slane %v1874, 1
        %v1876 = vmax.f32 %v1874, %v1875
        %v1877 = vmax.f32 %v1854, %v1855
        %v1878 = vrot.slane %v1877, 4
        %v1879 = vmax.f32 %v1877, %v1878
        %v1880 = vrot.slane %v1879, 2
        %v1881 = vmax.f32 %v1879, %v1880
        %v1882 = vrot.slane %v1881, 1
        %v1883 = vmax.f32 %v1881, %v1882
        %vm1884 = vcmask 125952
        %v1885 = vsel %vm1884, %v1801, 0.0
        %1886 = vadd.xlane.f32.xlu0 %v1885
        %v1887 = vpop.xlane.xlu0 %1886
        %vm1888 = vcmp.gt.f32.partialorder %v1887, 0.0
        %v1889 = vsel %vm1888, 1, 0
        %vm1890 = vcmp.eq.s32.totalorder %v1889, 1
        %vm1895 = vcmask 1041409
        %v1896 = vsel %vm1895, %v1869, %v1862
        %vm1897 = vcmask 1042434
        %v1898 = vsel %vm1897, %v1876, %v1896
        %vm1899 = vcmask 1043459
        %v1900 = vsel %vm1899, %v1883, %v1898
        %v1902 = vsel %vm1890, %v1900, 0.0
        %v1905 = vunpack.c.l.s4 1966171168
        %v1906 = vunpack.c.0.s8 %v1905
        %v1907 = vlaneseq
        %v1908 = vshrl.u32 %v1907, 7
        %v1909 = vsub.s32 %v1906, %v1908
        %v1910 = vrot.slane %v1902, %v1909
        %v1911 = vcombine.high %v1910, %v1910
        %v1913 = vunpack.c.l.s4 1966171168
        %v1914 = vunpack.c.0.s8 %v1913
        %v1915 = vlaneseq
        %v1916 = vshrl.u32 %v1915, 7
        %v1917 = vsub.s32 %v1914, %v1916
        %v1918 = vrot.slane %v1910, %v1917
        %v1920 = vunpack.c.l.s4 1966171168
        %v1921 = vunpack.c.0.s8 %v1920
        %v1922 = vlaneseq
        %v1923 = vshrl.u32 %v1922, 7
        %v1924 = vsub.s32 %v1921, %v1923
        %v1925 = vrot.slane %v1911, %v1924
        %v1926 = vcombine.high %v1918, %v1918
        %v1927 = vcombine.high %v1925, %v1925
        %v1928 = vlaneseq
        %v1929 = vshrl.u32 %v1928, 7
        %v1930 = vsub.s32 0, %v1929
        %v1931 = vrot.slane %v1918, %v1930
        %v1932 = vlaneseq
        %v1933 = vshrl.u32 %v1932, 7
        %v1934 = vsub.s32 0, %v1933
        %v1935 = vrot.slane %v1925, %v1934
        %v1936 = vlaneseq
        %v1937 = vshrl.u32 %v1936, 7
        %v1938 = vsub.s32 0, %v1937
        %v1939 = vrot.slane %v1926, %v1938
        %v1940 = vlaneseq
        %v1941 = vshrl.u32 %v1940, 7
        %v1942 = vsub.s32 0, %v1941
        %v1943 = vrot.slane %v1927, %v1942
        %v1948 = vsub.f32 %v1848, %v1931
        %v1949 = vsub.f32 %v1849, %v1931
        %v1950 = vsub.f32 %v1850, %v1935
        %v1951 = vsub.f32 %v1851, %v1935
        %v1952 = vsub.f32 %v1852, %v1939
        %v1953 = vsub.f32 %v1853, %v1939
        %v1954 = vsub.f32 %v1854, %v1943
        %v1955 = vsub.f32 %v1855, %v1943
        %v1956 = vmul.f32 %v1948, 1.442695
        %v1957 = vpow.pop %v1956
        %v1958 = vmul.f32 %v1949, 1.442695
        %v1959 = vpow.pop %v1958
        %v1960 = vmul.f32 %v1950, 1.442695
        %v1961 = vpow.pop %v1960
        %v1962 = vmul.f32 %v1951, 1.442695
        %v1963 = vpow.pop %v1962
        %v1964 = vmul.f32 %v1952, 1.442695
        %v1965 = vpow.pop %v1964
        %v1966 = vmul.f32 %v1953, 1.442695
        %v1967 = vpow.pop %v1966
        %v1968 = vmul.f32 %v1954, 1.442695
        %v1969 = vpow.pop %v1968
        %v1970 = vmul.f32 %v1955, 1.442695
        %v1971 = vpow.pop %v1970
        %v1972 = vadd.f32 %v1957, %v1959
        %v1973 = vrot.slane %v1972, 4
        %v1974 = vadd.f32 %v1972, %v1973
        %v1975 = vrot.slane %v1974, 2
        %v1976 = vadd.f32 %v1974, %v1975
        %v1977 = vrot.slane %v1976, 1
        %v1978 = vadd.f32 %v1976, %v1977
        %v1979 = vadd.f32 %v1961, %v1963
        %v1980 = vrot.slane %v1979, 4
        %v1981 = vadd.f32 %v1979, %v1980
        %v1982 = vrot.slane %v1981, 2
        %v1983 = vadd.f32 %v1981, %v1982
        %v1984 = vrot.slane %v1983, 1
        %v1985 = vadd.f32 %v1983, %v1984
        %v1986 = vadd.f32 %v1965, %v1967
        %v1987 = vrot.slane %v1986, 4
        %v1988 = vadd.f32 %v1986, %v1987
        %v1989 = vrot.slane %v1988, 2
        %v1990 = vadd.f32 %v1988, %v1989
        %v1991 = vrot.slane %v1990, 1
        %v1992 = vadd.f32 %v1990, %v1991
        %v1993 = vadd.f32 %v1969, %v1971
        %v1994 = vrot.slane %v1993, 4
        %v1995 = vadd.f32 %v1993, %v1994
        %v1996 = vrot.slane %v1995, 2
        %v1997 = vadd.f32 %v1995, %v1996
        %v1998 = vrot.slane %v1997, 1
        %v1999 = vadd.f32 %v1997, %v1998
        %v2000 = vmax.f32 %v1978, 1e-30
        %v2001 = vmax.f32 %v1985, 1e-30
        %v2002 = vmax.f32 %v1992, 1e-30
        %v2003 = vmax.f32 %v1999, 1e-30
        %v2004 = vlog2.pop %v2000
        %v2005 = vmul.f32 %v2004, 0.6931472
        %v2006 = vlog2.pop %v2001
        %v2007 = vmul.f32 %v2006, 0.6931472
        %v2008 = vlog2.pop %v2002
        %v2009 = vmul.f32 %v2008, 0.6931472
        %v2010 = vlog2.pop %v2003
        %v2011 = vmul.f32 %v2010, 0.6931472
        %v2016 = vsel %vm1895, %v2007, %v2005
        %v2017 = vsel %vm1897, %v2009, %v2016
        %v2018 = vsel %vm1899, %v2011, %v2017
        %v2020 = vadd.f32 %v1902, %v2018
        %v2021 = vsel %vm1890, %v2020, 0.0
        %2022 = vst [vmem:[%s637] sm:$0xf] %v2021
        %s2023 = sand.u32 %s417, 1
        %s2024 = scalar_lea.sflag [#allocation4], %s2023
        %s2025 = sand.u32 %s417, 1
        %s2026 = smul.addr %s2025, 16
        %s2027 = scalar_lea.vmem [#allocation3], %s2026
        %s2028 = sand.u32 %s37, 1
        %s2029 = scalar_lea.sflag [#allocation6], %s2028
        %s2030 = sand.u32 %s443, 1
        %s2031 = smul.addr %s2030, 32
        %s2032 = scalar_lea.vmem [#allocation5], %s2031
        %s2033 = sand.u32 %s37, 1
        %s2034 = scalar_lea.sflag [#allocation6], %s2033
        %s2035 = sand.u32 %s469, 1
        %s2036 = smul.addr %s2035, 4
        %s2037 = scalar_lea.vmem [#allocation7], %s2036
        // Predicated region
        $region89: #{model_forward.1} parent=87 // pred_check
          %p2038 = pneg %p427
        $region90: #{model_forward.1} parent=87 // pred_check_branch
          %2040 = sbr.rel (%p2038) target = $region92
        $region91: #{model_forward.1} parent=87 // pred_region
          %s2042 = ssub.s32 256, 256
          %2043 = vsyncadd %s2024, %s2042
          %s2044 = smul.addr %s37, 2
          %s2045 = smul.addr %s2044, 128
          %s2046 = scalar_lea.hbm %s17, %s2045
          %s2047 = sshll.u32 %s2027, 4
          %s2048 = int_to_ptr.vmem [resolvable:$true] %s2047
          %2053 = dma.vmem_to_hbm [thread:$0]  %s2048, 256, %s2046, %s2024, 128, 128, 8
        $region92: #{model_forward.1} parent=87 // pred_fallthru
          _
        // Predicated region
        $region93: #{model_forward.1} parent=87 // pred_check
          %p2054 = pneg %p453
        $region94: #{model_forward.1} parent=87 // pred_check_branch
          %2056 = sbr.rel (%p2054) target = $region96
        $region95: #{model_forward.1} parent=87 // pred_region
          %s2058 = ssub.s32 512, 512
          %2059 = vsyncadd %s2029, %s2058
          %s2060 = smul.addr %s37, 4
          %s2061 = smul.addr %s2060, 128
          %s2062 = scalar_lea.hbm %s18, %s2061
          %s2063 = sshll.u32 %s2032, 4
          %s2064 = int_to_ptr.vmem [resolvable:$true] %s2063
          %2069 = dma.vmem_to_hbm [thread:$0]  %s2064, 512, %s2062, %s2029, 128, 128, 8
        $region96: #{model_forward.1} parent=87 // pred_fallthru
          _
        // Predicated region
        $region97: #{model_forward.1} parent=87 // pred_check
          %p2070 = pneg %p479
        $region98: #{model_forward.1} parent=87 // pred_check_branch
          %2072 = sbr.rel (%p2070) target = $region100
        $region99: #{model_forward.1} parent=87 // pred_region
          %s2074 = ssub.s32 64, 64
          %2075 = vsyncadd %s2034, %s2074
          %s2076 = smul.addr %s37, 64
          %s2077 = scalar_lea.hbm %s19, %s2076
          %s2079 = sshll.u32 %s2037, 4
          %s2080 = int_to_ptr.vmem [resolvable:$true] %s2079
          %2082 = dma.vmem_to_hbm [thread:$0]  %s2080, 64, %s2077, %s2034
        $region100: #{model_forward.1} parent=87 // pred_fallthru
          _
      $region88: #{model_forward.1} parent=5 // pred_fallthru
        _
      %p2083 = scmp.le.s32.totalorder 2, %s32
      // Predicated region
      $region101: #{model_forward.1} parent=5 // pred_check
        %p2084 = pneg %p2083
      $region102: #{model_forward.1} parent=5 // pred_check_branch
        %2086 = sbr.rel (%p2084) target = $region104
      $region103: #{model_forward.1} parent=5 // pred_region
        %s2087 = ssub.s32 %s32, 2
        // Predicated region
        $region105: #{model_forward.1} parent=103 // pred_check
          %p2088 = pneg %p433
        $region106: #{model_forward.1} parent=103 // pred_check_branch
          %2090 = sbr.rel (%p2088) target = $region108
        $region107: #{model_forward.1} parent=103 // pred_region
          %s2091 = sand.u32 %s418, 1
          %s2092 = scalar_lea.sflag [#allocation4], %s2091
          %s2093 = sand.u32 %s418, 1
          %s2094 = smul.addr %s2093, 16
          %s2095 = scalar_lea.vmem [#allocation3], %s2094
          %2096 = dma.done %s2092, 256
        $region108: #{model_forward.1} parent=103 // pred_fallthru
          _
        // Predicated region
        $region109: #{model_forward.1} parent=103 // pred_check
          %p2097 = pneg %p459
        $region110: #{model_forward.1} parent=103 // pred_check_branch
          %2099 = sbr.rel (%p2097) target = $region112
        $region111: #{model_forward.1} parent=103 // pred_region
          %s2100 = sand.u32 %s38, 1
          %s2101 = scalar_lea.sflag [#allocation6], %s2100
          %s2102 = sand.u32 %s444, 1
          %s2103 = smul.addr %s2102, 32
          %s2104 = scalar_lea.vmem [#allocation5], %s2103
          %2105 = dma.done %s2101, 512
        $region112: #{model_forward.1} parent=103 // pred_fallthru
          _
        // Predicated region
        $region113: #{model_forward.1} parent=103 // pred_check
          %p2106 = pneg %p485
        $region114: #{model_forward.1} parent=103 // pred_check_branch
          %2108 = sbr.rel (%p2106) target = $region116
        $region115: #{model_forward.1} parent=103 // pred_region
          %s2109 = sand.u32 %s38, 1
          %s2110 = scalar_lea.sflag [#allocation6], %s2109
          %s2111 = sand.u32 %s470, 1
          %s2112 = smul.addr %s2111, 4
          %s2113 = scalar_lea.vmem [#allocation7], %s2112
          %2114 = dma.done %s2110, 64
        $region116: #{model_forward.1} parent=103 // pred_fallthru
          _
      $region104: #{model_forward.1} parent=5 // pred_fallthru
        _
    $region6: #{model_forward.1} parent=1 // loop_footer
      %s36 = sadd.s32 1, %s32
    $region7: #{model_forward.1} parent=1 // loop_footer_branch
      %31 = sbr.rel target = $region3
    $region8: #{model_forward.1} parent=1 // loop_exit
      _
    %2115 = vsyncpa [#allocation4], 1
    %s2116 = scalar_lea.sflag [#allocation4], 1
    %2117 = vsyncpa %s2116, 1
    %2118 = vsyncpa [#allocation6], 1
    %s2119 = scalar_lea.sflag [#allocation6], 1
    %2120 = vsyncpa %s2119, 1

</llo_original>
